<compile_context>
chip_gen: v5e
topology: v5e:2x2
jax: 0.10.0
libtpu: 0.0.40
codegen_flags: <defaults>
</compile_context>

<pallas_src>
import math
import numpy as np
import jax
import jax.numpy as jnp
from jax.experimental import pallas as pl
from jax.experimental.pallas import tpu as pltpu

# ----------------------------- configuration --------------------------------
NUM_CLASSES = 2            # DenseCap: background + object
POOL = 7                   # RoIAlign output size
SAMPLING_RATIO = 2
HIDDEN = 32                # TwoMLPHead representation size
EMBED = 32
LSTM_H = 32
VOCAB = 16
MAX_LEN = 6
BOS_TOKEN = 1
SCORE_THRESH = 0.05
NMS_THRESH = 0.5
DETECTIONS_PER_IMG = 10
BBOX_REG_W = (10.0, 10.0, 5.0, 5.0)
BBOX_XFORM_CLIP = math.log(1000.0 / 16.0)
TILE_R = 8                 # ROIs per RoIAlign grid step

_VMEM = pltpu.MemorySpace.VMEM


# ----------------------------- Pallas kernels --------------------------------
def roi_align_kernel(tile_img_ref, feat_ref, wy_ref, wxt_ref, out_ref):
    """Separable-bilinear RoIAlign for a tile of ROIs of one image.

    feat_ref: (1, C, H, W)   image feature map (selected via scalar prefetch)
    wy_ref:   (T, P, H)      per-ROI row-interpolation weights
    wxt_ref:  (T, W, P)      per-ROI col-interpolation weights (transposed)
    out_ref:  (T, C, P, P)
    pooled[c] = Wy @ feat[c] @ Wx^T ; channels folded into matmul rows/batch.
    """
    del tile_img_ref  # only used by the index_maps
    C, H, W = feat_ref.shape[1], feat_ref.shape[2], feat_ref.shape[3]
    T, P, _ = wy_ref.shape
    feat2d = feat_ref[0].reshape(C * H, W)                     # (C*H, W)
    for r in range(T):                                         # static unroll
        # stage 1: contract W for all channels at once
        u = jnp.dot(feat2d, wxt_ref[r],
                    preferred_element_type=jnp.float32)        # (C*H, P)
        u3 = u.reshape(C, H, P)
        # stage 2: batched (over C) contraction of H with the shared Wy
        wy_b = jnp.broadcast_to(wy_ref[r][None], (C, P, H))
        out_ref[r] = jax.lax.dot_general(
            wy_b, u3,
            dimension_numbers=(((2,), (1,)), ((0,), (0,))),
            preferred_element_type=jnp.float32)                # (C, P, P)


def fused_heads_kernel(x_ref, w6_ref, b6_ref, w7_ref, b7_ref,
                       wcb_ref, bcb_ref, wf_ref, bf_ref,
                       embed_ref, wih_ref, whh_ref, bl_ref, wv_ref, bv_ref,
                       feat_out_ref, cb_out_ref, tok_out_ref):
    """TwoMLPHead + FastRCNNPredictor + greedy LSTM caption decoder, fused."""
    x = x_ref[...]
    h = jnp.maximum(jnp.dot(x, w6_ref[...], preferred_element_type=jnp.float32)
                    + b6_ref[...], 0.0)
    h = jnp.maximum(jnp.dot(h, w7_ref[...], preferred_element_type=jnp.float32)
                    + b7_ref[...], 0.0)
    feat_out_ref[...] = h
    # cls logits + bbox regression in one lane-concatenated matmul
    cb_out_ref[...] = (jnp.dot(h, wcb_ref[...], preferred_element_type=jnp.float32)
                       + bcb_ref[...])
    # projection of box features into the caption embedding space
    femb = jnp.dot(h, wf_ref[...], preferred_element_type=jnp.float32) + bf_ref[...]

    R = x.shape[0]
    HH = whh_ref.shape[0]
    V = embed_ref.shape[0]
    gate_id = jax.lax.broadcasted_iota(jnp.int32, (R, 4 * HH), 1) // HH
    vocab_iota = jax.lax.broadcasted_iota(jnp.int32, (R, V), 1)

    def lstm_step(x_t, h_t, c_t):
        gates = (jnp.dot(x_t, wih_ref[...], preferred_element_type=jnp.float32)
                 + jnp.dot(h_t, whh_ref[...], preferred_element_type=jnp.float32)
                 + bl_ref[...])                                 # (R, 4H) lane-dense
        # full-width transcendentals + gate-id select (no 32-lane slices for EUP)
        act = jnp.where(gate_id == 2, jnp.tanh(gates), jax.nn.sigmoid(gates))
        i_g = act[:, 0 * HH:1 * HH]
        f_g = act[:, 1 * HH:2 * HH]
        g_g = act[:, 2 * HH:3 * HH]
        o_g = act[:, 3 * HH:4 * HH]
        c_new = f_g * c_t + i_g * g_g
        h_new = o_g * jnp.tanh(c_new)
        return h_new, c_new

    h_t = jnp.zeros((R, HH), jnp.float32)
    c_t = jnp.zeros((R, HH), jnp.float32)
    h_t, c_t = lstm_step(femb, h_t, c_t)              # condition on box feature

    tok = jnp.full((R, 1), BOS_TOKEN, jnp.int32)
    for t in range(MAX_LEN):                          # short static loop, unrolled
        one_hot = (vocab_iota == tok).astype(jnp.float32)       # (R, V)
        x_t = jnp.dot(one_hot, embed_ref[...],
                      preferred_element_type=jnp.float32)       # embedding lookup
        h_t, c_t = lstm_step(x_t, h_t, c_t)
        logits = (jnp.dot(h_t, wv_ref[...], preferred_element_type=jnp.float32)
                  + bv_ref[...])                                # (R, V)
        m = jnp.max(logits, axis=1, keepdims=True)
        # first-max argmax (matches torch/jnp tie-breaking)
        tok = jnp.min(jnp.where(logits >= m, vocab_iota, V),
                      axis=1, keepdims=True).astype(jnp.int32)
        tok_out_ref[:, t:t + 1] = tok


def postprocess_kernel(logits_t_ref, reg_t_ref, prop_t_ref, scores_t_ref, boxes_t_ref):
    """Fused softmax + BoxCoder.decode in a transposed, lane-dense layout.

    logits_t: (K, N)       reg_t/prop_t: (4, N*K)   (N on the lane axis)
    """
    lg = logits_t_ref[...]
    m = jnp.max(lg, axis=0, keepdims=True)
    e = jnp.exp(lg - m)
    scores_t_ref[...] = e / jnp.sum(e, axis=0, keepdims=True)

    reg = reg_t_ref[...]
    prop = prop_t_ref[...]
    rwx, rwy, rww, rwh = BBOX_REG_W
    x1 = prop[0:1]; y1 = prop[1:2]; x2 = prop[2:3]; y2 = prop[3:4]
    widths = x2 - x1
    heights = y2 - y1
    ctr_x = x1 + 0.5 * widths
    ctr_y = y1 + 0.5 * heights
    dx = reg[0:1] / rwx
    dy = reg[1:2] / rwy
    dw = jnp.minimum(reg[2:3] / rww, BBOX_XFORM_CLIP)
    dh = jnp.minimum(reg[3:4] / rwh, BBOX_XFORM_CLIP)
    pcx = dx * widths + ctr_x
    pcy = dy * heights + ctr_y
    pw = jnp.exp(dw) * widths
    ph = jnp.exp(dh) * heights
    boxes_t_ref[...] = jnp.concatenate(
        [pcx - 0.5 * pw, pcy - 0.5 * ph, pcx + 0.5 * pw, pcy + 0.5 * ph], axis=0)


# ----------------------------- RoIAlign glue ---------------------------------
def _roi_line_weights(start, length, P, size, sr):
    """(R, P, size) separable RoIAlign interpolation/averaging weights (glue)."""
    start = start.astype(jnp.float32)
    bin_size = length / P
    p = jnp.arange(P, dtype=jnp.float32)
    s = jnp.arange(sr, dtype=jnp.float32)
    coords = (start[:, None, None]
              + p[None, :, None] * bin_size[:, None, None]
              + (s[None, None, :] + 0.5) * bin_size[:, None, None] / sr)   # (R,P,S)
    valid = ((coords >= -1.0) & (coords <= size)).astype(jnp.float32)
    c = jnp.clip(coords, 0.0, size - 1.0)
    low = jnp.floor(c)
    frac = jnp.where(low >= size - 1, 0.0, c - low)
    low_i = low.astype(jnp.int32)
    high_i = jnp.minimum(low_i + 1, size - 1)
    w_low = (1.0 - frac) * valid
    w_high = frac * valid
    W = (jax.nn.one_hot(low_i, size, dtype=jnp.float32) * w_low[..., None]
         + jax.nn.one_hot(high_i, size, dtype=jnp.float32) * w_high[..., None]).sum(axis=2) / sr
    return W


def roi_align(features, proposals_list, spatial_scale, P, sr, tile_r=TILE_R):
    """RoIAlign (aligned=False). Tiles ROIs per grid step; features are indexed
    per tile via scalar prefetch (no gathered HBM copy of the feature map)."""
    N, C, H, W = features.shape

    padded, tile_img, real_idx = [], [], []
    offset = 0
    for i, props in enumerate(proposals_list):
        n = int(props.shape[0])
        n_pad = max(tile_r, ((n + tile_r - 1) // tile_r) * tile_r)
        if n_pad > n:
            props = jnp.concatenate(
                [props, jnp.zeros((n_pad - n, 4), jnp.float32)], axis=0)
        padded.append(props)
        tile_img += [i] * (n_pad // tile_r)
        real_idx += list(range(offset, offset + n))
        offset += n_pad
    rois = jnp.concatenate(padded, axis=0)
    tile_img = jnp.asarray(np.asarray(tile_img, dtype=np.int32))
    real_idx = np.asarray(real_idx, dtype=np.int32)
    R_pad = int(rois.shape[0])
    num_tiles = R_pad // tile_r

    r = rois * spatial_scale
    x1, y1, x2, y2 = r[:, 0], r[:, 1], r[:, 2], r[:, 3]
    roi_w = jnp.maximum(x2 - x1, 1.0)
    roi_h = jnp.maximum(y2 - y1, 1.0)
    wy = _roi_line_weights(y1, roi_h, P, H, sr)                                # (R,P,H)
    wxt = jnp.transpose(_roi_line_weights(x1, roi_w, P, W, sr), (0, 2, 1))     # (R,W,P)

    pooled = pl.pallas_call(
        roi_align_kernel,
        out_shape=jax.ShapeDtypeStruct((R_pad, C, P, P), jnp.float32),
        grid_spec=pltpu.PrefetchScalarGridSpec(
            num_scalar_prefetch=1,
            grid=(num_tiles,),
            in_specs=[
                pl.BlockSpec((1, C, H, W), lambda t, tb: (tb[t], 0, 0, 0)),
                pl.BlockSpec((tile_r, P, H), lambda t, tb: (t, 0, 0)),
                pl.BlockSpec((tile_r, W, P), lambda t, tb: (t, 0, 0)),
            ],
            out_specs=pl.BlockSpec((tile_r, C, P, P), lambda t, tb: (t, 0, 0, 0)),
        ),
        compiler_params=pltpu.CompilerParams(dimension_semantics=("parallel",)),
    )(tile_img, features, wy, wxt)
    return pooled, real_idx


# ----------------------------- host-side box ops -----------------------------
def _nms_np(boxes, scores, thresh):
    if boxes.shape[0] == 0:
        return np.zeros((0,), dtype=np.int64)
    x1, y1, x2, y2 = boxes[:, 0], boxes[:, 1], boxes[:, 2], boxes[:, 3]
    areas = (x2 - x1) * (y2 - y1)
    order = np.argsort(-scores)
    keep = []
    while order.size > 0:
        i = order[0]
        keep.append(i)
        if order.size == 1:
            break
        rest = order[1:]
        xx1 = np.maximum(x1[i], x1[rest]); yy1 = np.maximum(y1[i], y1[rest])
        xx2 = np.minimum(x2[i], x2[rest]); yy2 = np.minimum(y2[i], y2[rest])
        w = np.maximum(0.0, xx2 - xx1); h = np.maximum(0.0, yy2 - yy1)
        inter = w * h
        iou = inter / (areas[i] + areas[rest] - inter + 1e-12)
        order = rest[iou <= thresh]
    return np.asarray(keep, dtype=np.int64)


def _batched_nms_np(boxes, scores, labels, thresh):
    if boxes.shape[0] == 0:
        return np.zeros((0,), dtype=np.int64)
    max_coord = boxes.max()
    offsets = labels.astype(boxes.dtype) * (max_coord + 1.0)
    return _nms_np(boxes + offsets[:, None], scores, thresh)


# ----------------------------- parameters ------------------------------------
def make_params(key, in_channels, pool):
    d_in = in_channels * pool * pool
    ks = jax.random.split(key, 10)

    def init(k, shape, scale=0.1):
        return scale * jax.random.normal(k, shape, jnp.float32)

    return {
        "fc6_w": init(ks[0], (d_in, HIDDEN)), "fc6_b": jnp.zeros((1, HIDDEN), jnp.float32),
        "fc7_w": init(ks[1], (HIDDEN, HIDDEN)), "fc7_b": jnp.zeros((1, HIDDEN), jnp.float32),
        "cls_w": init(ks[2], (HIDDEN, NUM_CLASSES)), "cls_b": jnp.zeros((1, NUM_CLASSES), jnp.float32),
        "bbox_w": init(ks[3], (HIDDEN, NUM_CLASSES * 4)), "bbox_b": jnp.zeros((1, NUM_CLASSES * 4), jnp.float32),
        "feat_w": init(ks[4], (HIDDEN, EMBED)), "feat_b": jnp.zeros((1, EMBED), jnp.float32),
        "embed": init(ks[5], (VOCAB, EMBED)),
        "lstm_wih": init(ks[6], (EMBED, 4 * LSTM_H)),
        "lstm_whh": init(ks[7], (LSTM_H, 4 * LSTM_H)),
        "lstm_b": jnp.zeros((1, 4 * LSTM_H), jnp.float32),
        "vocab_w": init(ks[8], (LSTM_H, VOCAB)), "vocab_b": jnp.zeros((1, VOCAB), jnp.float32),
    }


# ----------------------------- the module ------------------------------------
class DenseCapRoIHeadsJAX:
    """Eval-mode forward of DenseCapRoIHeads, heavy compute in Pallas kernels."""

    def __init__(self, params, score_thresh=SCORE_THRESH, nms_thresh=NMS_THRESH,
                 detections_per_img=DETECTIONS_PER_IMG, pool=POOL,
                 sampling_ratio=SAMPLING_RATIO, return_features=False):
        self.params = params
        self.score_thresh = score_thresh
        self.nms_thresh = nms_thresh
        self.detections_per_img = detections_per_img
        self.pool = pool
        self.sr = sampling_ratio
        self.return_features = return_features
        # cls / bbox weight columns concatenated once: one lane-dense matmul.
        self.cb_w = jnp.concatenate([params["cls_w"], params["bbox_w"]], axis=1)
        self.cb_b = jnp.concatenate([params["cls_b"], params["bbox_b"]], axis=1)

    # ---- fused box_head + box_predictor + feat projection + caption decoder ----
    def _run_fused_heads(self, pooled_flat):
        p = self.params
        R, D = pooled_flat.shape
        TR = min(128, R)             # row tile; keeps VMEM bounded at real sizes
        num_tiles = pl.cdiv(R, TR)

        def full2d(a):
            return pl.BlockSpec(a.shape, lambda i: (0, 0))

        weights = (p["fc6_w"], p["fc6_b"], p["fc7_w"], p["fc7_b"],
                   self.cb_w, self.cb_b, p["feat_w"], p["feat_b"],
                   p["embed"], p["lstm_wih"], p["lstm_whh"], p["lstm_b"],
                   p["vocab_w"], p["vocab_b"])
        in_specs = [pl.BlockSpec((TR, D), lambda i: (i, 0))] + [full2d(a) for a in weights]
        out_specs = (pl.BlockSpec((TR, HIDDEN), lambda i: (i, 0)),
                     pl.BlockSpec((TR, NUM_CLASSES * 5), lambda i: (i, 0)),
                     pl.BlockSpec((TR, MAX_LEN), lambda i: (i, 0)))
        out_shape = (jax.ShapeDtypeStruct((R, HIDDEN), jnp.float32),
                     jax.ShapeDtypeStruct((R, NUM_CLASSES * 5), jnp.float32),
                     jax.ShapeDtypeStruct((R, MAX_LEN), jnp.int32))
        return pl.pallas_call(
            fused_heads_kernel,
            out_shape=out_shape,
            grid=(num_tiles,),
            in_specs=in_specs,
            out_specs=out_specs,
            compiler_params=pltpu.CompilerParams(dimension_semantics=("parallel",)),
        )(pooled_flat, *weights)

    # ---- postprocess_detections ----
    def postprocess_detections(self, logits, box_regression, caption_predicts,
                               prop_cat, boxes_per_image, image_shapes):
        Ntot, K = logits.shape
        M = Ntot * K
        # transposed, lane-dense layout (N on the lane axis) for the fused kernel
        logits_t = logits.T                                                    # (K, N)
        reg_t = box_regression.reshape(Ntot, K, 4).transpose(2, 0, 1).reshape(4, M)
        prop_t = jnp.repeat(prop_cat.T, K, axis=1)                             # (4, M)

        scores_t, boxes_t = pl.pallas_call(
            postprocess_kernel,
            out_shape=(jax.ShapeDtypeStruct((K, Ntot), jnp.float32),
                       jax.ShapeDtypeStruct((4, M), jnp.float32)),
            in_specs=[pl.BlockSpec(memory_space=_VMEM)] * 3,
            out_specs=(pl.BlockSpec(memory_space=_VMEM),
                       pl.BlockSpec(memory_space=_VMEM)),
        )(logits_t, reg_t, prop_t)

        scores_all = scores_t.T                       # (N, K)
        decoded = boxes_t.T.reshape(Ntot, K, 4)       # (N, K, 4)
        jax.block_until_ready((decoded, scores_all, caption_predicts))

        decoded_np = np.asarray(decoded)
        scores_np = np.asarray(scores_all)
        caps_np = np.asarray(caption_predicts)

        all_boxes, all_scores, all_caps = [], [], []
        start = 0
        for n, image_shape in zip(boxes_per_image, image_shapes):
            boxes = decoded_np[start:start + n].copy()        # (n, K, 4)
            scores = scores_np[start:start + n]               # (n, K)
            captions = caps_np[start:start + n]               # (n, T)
            start += n
            Himg, Wimg = image_shape
            boxes[..., 0::2] = np.clip(boxes[..., 0::2], 0.0, float(Wimg))
            boxes[..., 1::2] = np.clip(boxes[..., 1::2], 0.0, float(Himg))
            labels = np.tile(np.arange(K), (n, 1))
            boxes = boxes[:, 1:].reshape(-1, 4)
            scores = scores[:, 1:].reshape(-1)
            labels = labels[:, 1:].reshape(-1)

            inds = np.nonzero(scores > self.score_thresh)[0]
            boxes, scores, labels, captions = boxes[inds], scores[inds], labels[inds], captions[inds]

            ws, hs = boxes[:, 2] - boxes[:, 0], boxes[:, 3] - boxes[:, 1]
            keep = np.nonzero((ws >= 0.01) & (hs >= 0.01))[0]
            boxes, scores, labels, captions = boxes[keep], scores[keep], labels[keep], captions[keep]

            # TODO(synk): batched NMS + dynamic-shape filtering run on host (no clean Pallas equivalent).
            keep = _batched_nms_np(boxes, scores, labels, self.nms_thresh)[: self.detections_per_img]
            boxes, scores, captions = boxes[keep], scores[keep], captions[keep]

            all_boxes.append(jnp.asarray(boxes, jnp.float32))
            all_scores.append(jnp.asarray(scores, jnp.float32))
            all_caps.append(jnp.asarray(captions, jnp.int32))
        return all_boxes, all_scores, all_caps

    # ---- forward (eval mode) ----
    def __call__(self, features, proposals, image_shapes, targets=None):
        if targets is not None:
            # TODO(synk): training branch (IoU matching, balanced pos/neg sampling,
            # pack_padded_sequence + detect/caption losses) is data-dependent and
            # dynamic-shaped; only the eval forward path is implemented here.
            raise NotImplementedError("training mode not implemented")

        boxes_per_image = [int(pr.shape[0]) for pr in proposals]
        prop_cat = jnp.concatenate(proposals, axis=0)
        # NOTE: single uniform scale, as in the original implementation.
        spatial_scale = features.shape[2] / float(image_shapes[0][0])

        pooled, real_idx = roi_align(features, proposals, spatial_scale, self.pool, self.sr)
        R_pad = pooled.shape[0]
        pooled_flat = pooled.reshape(R_pad, -1)

        box_features, cls_bbox, captions = self._run_fused_heads(pooled_flat)

        ridx = jnp.asarray(real_idx)
        sel = cls_bbox[ridx]
        logits = sel[:, :NUM_CLASSES]
        box_regression = sel[:, NUM_CLASSES:]
        caption_predicts = captions[ridx]

        boxes, scores, caps = self.postprocess_detections(
            logits, box_regression, caption_predicts, prop_cat, boxes_per_image, image_shapes)

        result = []
        for i in range(len(boxes)):
            result.append({"boxes": boxes[i], "caps": caps[i], "scores": scores[i]})
        return result, {}


# ----------------------------- demo / smoke test -----------------------------
if __name__ == "__main__":
    key = jax.random.PRNGKey(0)
    kf, kp1, kp2, kw = jax.random.split(key, 4)

    B, C, H, W = 2, 4, 16, 16
    features = jax.random.normal(kf, (B, C, H, W), jnp.float32)     # NCHW

    def make_props(k, n, img=32.0):
        xy = jax.random.uniform(k, (n, 2), minval=0.0, maxval=img - 12.0)
        wh = jax.random.uniform(jax.random.fold_in(k, 1), (n, 2), minval=4.0, maxval=12.0)
        return jnp.concatenate([xy, xy + wh], axis=1).astype(jnp.float32)

    proposals = [make_props(kp1, 8), make_props(kp2, 8)]
    image_shapes = [(32, 32), (32, 32)]

    params = make_params(kw, C, POOL)
    model = DenseCapRoIHeadsJAX(params)

    result, losses = model(features, proposals, image_shapes)
    jax.block_until_ready(result)
    print("KERNEL_OK")
</pallas_src>

<mosaic_0001>
module attributes {stable_mosaic.version = 11 : i64} {
  func.func @roi_align_kernel(%arg0: i32, %arg1: memref<2xi32, #tpu.memory_space<smem>>, %arg2: memref<1x4x16x16xf32, #tpu.memory_space<vmem>>, %arg3: memref<8x7x16xf32, #tpu.memory_space<vmem>>, %arg4: memref<8x16x7xf32, #tpu.memory_space<vmem>>, %arg5: memref<8x4x7x7xf32, #tpu.memory_space<vmem>>) attributes {dimension_semantics = [#tpu.dimension_semantics<parallel>], iteration_bounds = array<i64: 2>, scalar_prefetch = 1 : i64, scratch_operands = 0 : i64, tpu.core_type = #tpu.core_type<tc>, window_params = [{transform_indices = @transform_0, window_bounds = array<i64: 1, 4, 16, 16>}, {transform_indices = @transform_1, window_bounds = array<i64: 8, 7, 16>}, {transform_indices = @transform_2, window_bounds = array<i64: 8, 16, 7>}, {transform_indices = @transform_3, window_bounds = array<i64: 8, 4, 7, 7>}]} {
    %c0 = arith.constant 0 : index
    %c0_0 = arith.constant 0 : index
    %c0_1 = arith.constant 0 : index
    %c0_2 = arith.constant 0 : index
    %0 = vector.load %arg2[%c0, %c0_0, %c0_1, %c0_2] : memref<1x4x16x16xf32, #tpu.memory_space<vmem>>, vector<1x4x16x16xf32>
    %1 = vector.shape_cast %0 : vector<1x4x16x16xf32> to vector<4x16x16xf32>
    %2 = vector.shape_cast %1 : vector<4x16x16xf32> to vector<64x16xf32>
    %c0_3 = arith.constant 0 : index
    %c0_4 = arith.constant 0 : index
    %c0_5 = arith.constant 0 : index
    %3 = vector.load %arg4[%c0_3, %c0_4, %c0_5] : memref<8x16x7xf32, #tpu.memory_space<vmem>>, vector<1x16x7xf32>
    %4 = vector.shape_cast %3 : vector<1x16x7xf32> to vector<16x7xf32>
    %cst = arith.constant dense<0.000000e+00> : vector<64x7xf32>
    %5 = tpu.matmul %2, %4, %cst {dimension_numbers = #tpu.dot_dimension_numbers<[1], [0], [0], [1], [0, 0, 1, 1], [], []>} : vector<64x16xf32>, vector<16x7xf32>, vector<64x7xf32> -> vector<64x7xf32>
    %6 = vector.shape_cast %5 : vector<64x7xf32> to vector<4x16x7xf32>
    %c0_6 = arith.constant 0 : index
    %c0_7 = arith.constant 0 : index
    %c0_8 = arith.constant 0 : index
    %7 = vector.load %arg3[%c0_6, %c0_7, %c0_8] : memref<8x7x16xf32, #tpu.memory_space<vmem>>, vector<1x7x16xf32>
    %8 = vector.shape_cast %7 : vector<1x7x16xf32> to vector<7x16xf32>
    %9 = vector.shape_cast %8 : vector<7x16xf32> to vector<1x7x16xf32>
    %10 = vector.shape_cast %9 : vector<1x7x16xf32> to vector<1x7x16xf32>
    %11 = vector.broadcast %10 : vector<1x7x16xf32> to vector<4x7x16xf32>
    %cst_9 = arith.constant dense<0.000000e+00> : vector<4x7x7xf32>
    %12 = tpu.matmul %11, %6, %cst_9 {dimension_numbers = #tpu.dot_dimension_numbers<[2], [1], [1], [2], [0, 0, 0, 1, 1, 2], [0], [0]>} : vector<4x7x16xf32>, vector<4x16x7xf32>, vector<4x7x7xf32> -> vector<4x7x7xf32>
    %c0_10 = arith.constant 0 : index
    %c0_11 = arith.constant 0 : index
    %c0_12 = arith.constant 0 : index
    %c0_13 = arith.constant 0 : index
    %13 = vector.load %arg5[%c0_10, %c0_11, %c0_12, %c0_13] : memref<8x4x7x7xf32, #tpu.memory_space<vmem>>, vector<1x4x7x7xf32>
    %14 = vector.shape_cast %13 : vector<1x4x7x7xf32> to vector<4x7x7xf32>
    %15 = vector.shape_cast %12 : vector<4x7x7xf32> to vector<1x4x7x7xf32>
    tpu.vector_store %arg5[%c0_10, %c0_11, %c0_12, %c0_13], %15 {strides = array<i32>} : memref<8x4x7x7xf32, #tpu.memory_space<vmem>>, vector<1x4x7x7xf32>,
    %c1 = arith.constant 1 : index
    %c0_14 = arith.constant 0 : index
    %c0_15 = arith.constant 0 : index
    %16 = vector.load %arg4[%c1, %c0_14, %c0_15] : memref<8x16x7xf32, #tpu.memory_space<vmem>>, vector<1x16x7xf32>
    %17 = vector.shape_cast %16 : vector<1x16x7xf32> to vector<16x7xf32>
    %cst_16 = arith.constant dense<0.000000e+00> : vector<64x7xf32>
    %18 = tpu.matmul %2, %17, %cst_16 {dimension_numbers = #tpu.dot_dimension_numbers<[1], [0], [0], [1], [0, 0, 1, 1], [], []>} : vector<64x16xf32>, vector<16x7xf32>, vector<64x7xf32> -> vector<64x7xf32>
    %19 = vector.shape_cast %18 : vector<64x7xf32> to vector<4x16x7xf32>
    %c1_17 = arith.constant 1 : index
    %c0_18 = arith.constant 0 : index
    %c0_19 = arith.constant 0 : index
    %20 = vector.load %arg3[%c1_17, %c0_18, %c0_19] : memref<8x7x16xf32, #tpu.memory_space<vmem>>, vector<1x7x16xf32>
    %21 = vector.shape_cast %20 : vector<1x7x16xf32> to vector<7x16xf32>
    %22 = vector.shape_cast %21 : vector<7x16xf32> to vector<1x7x16xf32>
    %23 = vector.shape_cast %22 : vector<1x7x16xf32> to vector<1x7x16xf32>
    %24 = vector.broadcast %23 : vector<1x7x16xf32> to vector<4x7x16xf32>
    %cst_20 = arith.constant dense<0.000000e+00> : vector<4x7x7xf32>
    %25 = tpu.matmul %24, %19, %cst_20 {dimension_numbers = #tpu.dot_dimension_numbers<[2], [1], [1], [2], [0, 0, 0, 1, 1, 2], [0], [0]>} : vector<4x7x16xf32>, vector<4x16x7xf32>, vector<4x7x7xf32> -> vector<4x7x7xf32>
    %c1_21 = arith.constant 1 : index
    %c0_22 = arith.constant 0 : index
    %c0_23 = arith.constant 0 : index
    %c0_24 = arith.constant 0 : index
    %26 = vector.load %arg5[%c1_21, %c0_22, %c0_23, %c0_24] : memref<8x4x7x7xf32, #tpu.memory_space<vmem>>, vector<1x4x7x7xf32>
    %27 = vector.shape_cast %26 : vector<1x4x7x7xf32> to vector<4x7x7xf32>
    %28 = vector.shape_cast %25 : vector<4x7x7xf32> to vector<1x4x7x7xf32>
    tpu.vector_store %arg5[%c1_21, %c0_22, %c0_23, %c0_24], %28 {strides = array<i32>} : memref<8x4x7x7xf32, #tpu.memory_space<vmem>>, vector<1x4x7x7xf32>,
    %c2 = arith.constant 2 : index
    %c0_25 = arith.constant 0 : index
    %c0_26 = arith.constant 0 : index
    %29 = vector.load %arg4[%c2, %c0_25, %c0_26] : memref<8x16x7xf32, #tpu.memory_space<vmem>>, vector<1x16x7xf32>
    %30 = vector.shape_cast %29 : vector<1x16x7xf32> to vector<16x7xf32>
    %cst_27 = arith.constant dense<0.000000e+00> : vector<64x7xf32>
    %31 = tpu.matmul %2, %30, %cst_27 {dimension_numbers = #tpu.dot_dimension_numbers<[1], [0], [0], [1], [0, 0, 1, 1], [], []>} : vector<64x16xf32>, vector<16x7xf32>, vector<64x7xf32> -> vector<64x7xf32>
    %32 = vector.shape_cast %31 : vector<64x7xf32> to vector<4x16x7xf32>
    %c2_28 = arith.constant 2 : index
    %c0_29 = arith.constant 0 : index
    %c0_30 = arith.constant 0 : index
    %33 = vector.load %arg3[%c2_28, %c0_29, %c0_30] : memref<8x7x16xf32, #tpu.memory_space<vmem>>, vector<1x7x16xf32>
    %34 = vector.shape_cast %33 : vector<1x7x16xf32> to vector<7x16xf32>
    %35 = vector.shape_cast %34 : vector<7x16xf32> to vector<1x7x16xf32>
    %36 = vector.shape_cast %35 : vector<1x7x16xf32> to vector<1x7x16xf32>
    %37 = vector.broadcast %36 : vector<1x7x16xf32> to vector<4x7x16xf32>
    %cst_31 = arith.constant dense<0.000000e+00> : vector<4x7x7xf32>
    %38 = tpu.matmul %37, %32, %cst_31 {dimension_numbers = #tpu.dot_dimension_numbers<[2], [1], [1], [2], [0, 0, 0, 1, 1, 2], [0], [0]>} : vector<4x7x16xf32>, vector<4x16x7xf32>, vector<4x7x7xf32> -> vector<4x7x7xf32>
    %c2_32 = arith.constant 2 : index
    %c0_33 = arith.constant 0 : index
    %c0_34 = arith.constant 0 : index
    %c0_35 = arith.constant 0 : index
    %39 = vector.load %arg5[%c2_32, %c0_33, %c0_34, %c0_35] : memref<8x4x7x7xf32, #tpu.memory_space<vmem>>, vector<1x4x7x7xf32>
    %40 = vector.shape_cast %39 : vector<1x4x7x7xf32> to vector<4x7x7xf32>
    %41 = vector.shape_cast %38 : vector<4x7x7xf32> to vector<1x4x7x7xf32>
    tpu.vector_store %arg5[%c2_32, %c0_33, %c0_34, %c0_35], %41 {strides = array<i32>} : memref<8x4x7x7xf32, #tpu.memory_space<vmem>>, vector<1x4x7x7xf32>,
    %c3 = arith.constant 3 : index
    %c0_36 = arith.constant 0 : index
    %c0_37 = arith.constant 0 : index
    %42 = vector.load %arg4[%c3, %c0_36, %c0_37] : memref<8x16x7xf32, #tpu.memory_space<vmem>>, vector<1x16x7xf32>
    %43 = vector.shape_cast %42 : vector<1x16x7xf32> to vector<16x7xf32>
    %cst_38 = arith.constant dense<0.000000e+00> : vector<64x7xf32>
    %44 = tpu.matmul %2, %43, %cst_38 {dimension_numbers = #tpu.dot_dimension_numbers<[1], [0], [0], [1], [0, 0, 1, 1], [], []>} : vector<64x16xf32>, vector<16x7xf32>, vector<64x7xf32> -> vector<64x7xf32>
    %45 = vector.shape_cast %44 : vector<64x7xf32> to vector<4x16x7xf32>
    %c3_39 = arith.constant 3 : index
    %c0_40 = arith.constant 0 : index
    %c0_41 = arith.constant 0 : index
    %46 = vector.load %arg3[%c3_39, %c0_40, %c0_41] : memref<8x7x16xf32, #tpu.memory_space<vmem>>, vector<1x7x16xf32>
    %47 = vector.shape_cast %46 : vector<1x7x16xf32> to vector<7x16xf32>
    %48 = vector.shape_cast %47 : vector<7x16xf32> to vector<1x7x16xf32>
    %49 = vector.shape_cast %48 : vector<1x7x16xf32> to vector<1x7x16xf32>
    %50 = vector.broadcast %49 : vector<1x7x16xf32> to vector<4x7x16xf32>
    %cst_42 = arith.constant dense<0.000000e+00> : vector<4x7x7xf32>
    %51 = tpu.matmul %50, %45, %cst_42 {dimension_numbers = #tpu.dot_dimension_numbers<[2], [1], [1], [2], [0, 0, 0, 1, 1, 2], [0], [0]>} : vector<4x7x16xf32>, vector<4x16x7xf32>, vector<4x7x7xf32> -> vector<4x7x7xf32>
    %c3_43 = arith.constant 3 : index
    %c0_44 = arith.constant 0 : index
    %c0_45 = arith.constant 0 : index
    %c0_46 = arith.constant 0 : index
    %52 = vector.load %arg5[%c3_43, %c0_44, %c0_45, %c0_46] : memref<8x4x7x7xf32, #tpu.memory_space<vmem>>, vector<1x4x7x7xf32>
    %53 = vector.shape_cast %52 : vector<1x4x7x7xf32> to vector<4x7x7xf32>
    %54 = vector.shape_cast %51 : vector<4x7x7xf32> to vector<1x4x7x7xf32>
    tpu.vector_store %arg5[%c3_43, %c0_44, %c0_45, %c0_46], %54 {strides = array<i32>} : memref<8x4x7x7xf32, #tpu.memory_space<vmem>>, vector<1x4x7x7xf32>,
    %c4 = arith.constant 4 : index
    %c0_47 = arith.constant 0 : index
    %c0_48 = arith.constant 0 : index
    %55 = vector.load %arg4[%c4, %c0_47, %c0_48] : memref<8x16x7xf32, #tpu.memory_space<vmem>>, vector<1x16x7xf32>
    %56 = vector.shape_cast %55 : vector<1x16x7xf32> to vector<16x7xf32>
    %cst_49 = arith.constant dense<0.000000e+00> : vector<64x7xf32>
    %57 = tpu.matmul %2, %56, %cst_49 {dimension_numbers = #tpu.dot_dimension_numbers<[1], [0], [0], [1], [0, 0, 1, 1], [], []>} : vector<64x16xf32>, vector<16x7xf32>, vector<64x7xf32> -> vector<64x7xf32>
    %58 = vector.shape_cast %57 : vector<64x7xf32> to vector<4x16x7xf32>
    %c4_50 = arith.constant 4 : index
    %c0_51 = arith.constant 0 : index
    %c0_52 = arith.constant 0 : index
    %59 = vector.load %arg3[%c4_50, %c0_51, %c0_52] : memref<8x7x16xf32, #tpu.memory_space<vmem>>, vector<1x7x16xf32>
    %60 = vector.shape_cast %59 : vector<1x7x16xf32> to vector<7x16xf32>
    %61 = vector.shape_cast %60 : vector<7x16xf32> to vector<1x7x16xf32>
    %62 = vector.shape_cast %61 : vector<1x7x16xf32> to vector<1x7x16xf32>
    %63 = vector.broadcast %62 : vector<1x7x16xf32> to vector<4x7x16xf32>
    %cst_53 = arith.constant dense<0.000000e+00> : vector<4x7x7xf32>
    %64 = tpu.matmul %63, %58, %cst_53 {dimension_numbers = #tpu.dot_dimension_numbers<[2], [1], [1], [2], [0, 0, 0, 1, 1, 2], [0], [0]>} : vector<4x7x16xf32>, vector<4x16x7xf32>, vector<4x7x7xf32> -> vector<4x7x7xf32>
    %c4_54 = arith.constant 4 : index
    %c0_55 = arith.constant 0 : index
    %c0_56 = arith.constant 0 : index
    %c0_57 = arith.constant 0 : index
    %65 = vector.load %arg5[%c4_54, %c0_55, %c0_56, %c0_57] : memref<8x4x7x7xf32, #tpu.memory_space<vmem>>, vector<1x4x7x7xf32>
    %66 = vector.shape_cast %65 : vector<1x4x7x7xf32> to vector<4x7x7xf32>
    %67 = vector.shape_cast %64 : vector<4x7x7xf32> to vector<1x4x7x7xf32>
    tpu.vector_store %arg5[%c4_54, %c0_55, %c0_56, %c0_57], %67 {strides = array<i32>} : memref<8x4x7x7xf32, #tpu.memory_space<vmem>>, vector<1x4x7x7xf32>,
    %c5 = arith.constant 5 : index
    %c0_58 = arith.constant 0 : index
    %c0_59 = arith.constant 0 : index
    %68 = vector.load %arg4[%c5, %c0_58, %c0_59] : memref<8x16x7xf32, #tpu.memory_space<vmem>>, vector<1x16x7xf32>
    %69 = vector.shape_cast %68 : vector<1x16x7xf32> to vector<16x7xf32>
    %cst_60 = arith.constant dense<0.000000e+00> : vector<64x7xf32>
    %70 = tpu.matmul %2, %69, %cst_60 {dimension_numbers = #tpu.dot_dimension_numbers<[1], [0], [0], [1], [0, 0, 1, 1], [], []>} : vector<64x16xf32>, vector<16x7xf32>, vector<64x7xf32> -> vector<64x7xf32>
    %71 = vector.shape_cast %70 : vector<64x7xf32> to vector<4x16x7xf32>
    %c5_61 = arith.constant 5 : index
    %c0_62 = arith.constant 0 : index
    %c0_63 = arith.constant 0 : index
    %72 = vector.load %arg3[%c5_61, %c0_62, %c0_63] : memref<8x7x16xf32, #tpu.memory_space<vmem>>, vector<1x7x16xf32>
    %73 = vector.shape_cast %72 : vector<1x7x16xf32> to vector<7x16xf32>
    %74 = vector.shape_cast %73 : vector<7x16xf32> to vector<1x7x16xf32>
    %75 = vector.shape_cast %74 : vector<1x7x16xf32> to vector<1x7x16xf32>
    %76 = vector.broadcast %75 : vector<1x7x16xf32> to vector<4x7x16xf32>
    %cst_64 = arith.constant dense<0.000000e+00> : vector<4x7x7xf32>
    %77 = tpu.matmul %76, %71, %cst_64 {dimension_numbers = #tpu.dot_dimension_numbers<[2], [1], [1], [2], [0, 0, 0, 1, 1, 2], [0], [0]>} : vector<4x7x16xf32>, vector<4x16x7xf32>, vector<4x7x7xf32> -> vector<4x7x7xf32>
    %c5_65 = arith.constant 5 : index
    %c0_66 = arith.constant 0 : index
    %c0_67 = arith.constant 0 : index
    %c0_68 = arith.constant 0 : index
    %78 = vector.load %arg5[%c5_65, %c0_66, %c0_67, %c0_68] : memref<8x4x7x7xf32, #tpu.memory_space<vmem>>, vector<1x4x7x7xf32>
    %79 = vector.shape_cast %78 : vector<1x4x7x7xf32> to vector<4x7x7xf32>
    %80 = vector.shape_cast %77 : vector<4x7x7xf32> to vector<1x4x7x7xf32>
    tpu.vector_store %arg5[%c5_65, %c0_66, %c0_67, %c0_68], %80 {strides = array<i32>} : memref<8x4x7x7xf32, #tpu.memory_space<vmem>>, vector<1x4x7x7xf32>,
    %c6 = arith.constant 6 : index
    %c0_69 = arith.constant 0 : index
    %c0_70 = arith.constant 0 : index
    %81 = vector.load %arg4[%c6, %c0_69, %c0_70] : memref<8x16x7xf32, #tpu.memory_space<vmem>>, vector<1x16x7xf32>
    %82 = vector.shape_cast %81 : vector<1x16x7xf32> to vector<16x7xf32>
    %cst_71 = arith.constant dense<0.000000e+00> : vector<64x7xf32>
    %83 = tpu.matmul %2, %82, %cst_71 {dimension_numbers = #tpu.dot_dimension_numbers<[1], [0], [0], [1], [0, 0, 1, 1], [], []>} : vector<64x16xf32>, vector<16x7xf32>, vector<64x7xf32> -> vector<64x7xf32>
    %84 = vector.shape_cast %83 : vector<64x7xf32> to vector<4x16x7xf32>
    %c6_72 = arith.constant 6 : index
    %c0_73 = arith.constant 0 : index
    %c0_74 = arith.constant 0 : index
    %85 = vector.load %arg3[%c6_72, %c0_73, %c0_74] : memref<8x7x16xf32, #tpu.memory_space<vmem>>, vector<1x7x16xf32>
    %86 = vector.shape_cast %85 : vector<1x7x16xf32> to vector<7x16xf32>
    %87 = vector.shape_cast %86 : vector<7x16xf32> to vector<1x7x16xf32>
    %88 = vector.shape_cast %87 : vector<1x7x16xf32> to vector<1x7x16xf32>
    %89 = vector.broadcast %88 : vector<1x7x16xf32> to vector<4x7x16xf32>
    %cst_75 = arith.constant dense<0.000000e+00> : vector<4x7x7xf32>
    %90 = tpu.matmul %89, %84, %cst_75 {dimension_numbers = #tpu.dot_dimension_numbers<[2], [1], [1], [2], [0, 0, 0, 1, 1, 2], [0], [0]>} : vector<4x7x16xf32>, vector<4x16x7xf32>, vector<4x7x7xf32> -> vector<4x7x7xf32>
    %c6_76 = arith.constant 6 : index
    %c0_77 = arith.constant 0 : index
    %c0_78 = arith.constant 0 : index
    %c0_79 = arith.constant 0 : index
    %91 = vector.load %arg5[%c6_76, %c0_77, %c0_78, %c0_79] : memref<8x4x7x7xf32, #tpu.memory_space<vmem>>, vector<1x4x7x7xf32>
    %92 = vector.shape_cast %91 : vector<1x4x7x7xf32> to vector<4x7x7xf32>
    %93 = vector.shape_cast %90 : vector<4x7x7xf32> to vector<1x4x7x7xf32>
    tpu.vector_store %arg5[%c6_76, %c0_77, %c0_78, %c0_79], %93 {strides = array<i32>} : memref<8x4x7x7xf32, #tpu.memory_space<vmem>>, vector<1x4x7x7xf32>,
    %c7 = arith.constant 7 : index
    %c0_80 = arith.constant 0 : index
    %c0_81 = arith.constant 0 : index
    %94 = vector.load %arg4[%c7, %c0_80, %c0_81] : memref<8x16x7xf32, #tpu.memory_space<vmem>>, vector<1x16x7xf32>
    %95 = vector.shape_cast %94 : vector<1x16x7xf32> to vector<16x7xf32>
    %cst_82 = arith.constant dense<0.000000e+00> : vector<64x7xf32>
    %96 = tpu.matmul %2, %95, %cst_82 {dimension_numbers = #tpu.dot_dimension_numbers<[1], [0], [0], [1], [0, 0, 1, 1], [], []>} : vector<64x16xf32>, vector<16x7xf32>, vector<64x7xf32> -> vector<64x7xf32>
    %97 = vector.shape_cast %96 : vector<64x7xf32> to vector<4x16x7xf32>
    %c7_83 = arith.constant 7 : index
    %c0_84 = arith.constant 0 : index
    %c0_85 = arith.constant 0 : index
    %98 = vector.load %arg3[%c7_83, %c0_84, %c0_85] : memref<8x7x16xf32, #tpu.memory_space<vmem>>, vector<1x7x16xf32>
    %99 = vector.shape_cast %98 : vector<1x7x16xf32> to vector<7x16xf32>
    %100 = vector.shape_cast %99 : vector<7x16xf32> to vector<1x7x16xf32>
    %101 = vector.shape_cast %100 : vector<1x7x16xf32> to vector<1x7x16xf32>
    %102 = vector.broadcast %101 : vector<1x7x16xf32> to vector<4x7x16xf32>
    %cst_86 = arith.constant dense<0.000000e+00> : vector<4x7x7xf32>
    %103 = tpu.matmul %102, %97, %cst_86 {dimension_numbers = #tpu.dot_dimension_numbers<[2], [1], [1], [2], [0, 0, 0, 1, 1, 2], [0], [0]>} : vector<4x7x16xf32>, vector<4x16x7xf32>, vector<4x7x7xf32> -> vector<4x7x7xf32>
    %c7_87 = arith.constant 7 : index
    %c0_88 = arith.constant 0 : index
    %c0_89 = arith.constant 0 : index
    %c0_90 = arith.constant 0 : index
    %104 = vector.load %arg5[%c7_87, %c0_88, %c0_89, %c0_90] : memref<8x4x7x7xf32, #tpu.memory_space<vmem>>, vector<1x4x7x7xf32>
    %105 = vector.shape_cast %104 : vector<1x4x7x7xf32> to vector<4x7x7xf32>
    %106 = vector.shape_cast %103 : vector<4x7x7xf32> to vector<1x4x7x7xf32>
    tpu.vector_store %arg5[%c7_87, %c0_88, %c0_89, %c0_90], %106 {strides = array<i32>} : memref<8x4x7x7xf32, #tpu.memory_space<vmem>>, vector<1x4x7x7xf32>,
    return
  }
  func.func @transform_0(%arg0: i32, %arg1: memref<2xi32, #tpu.memory_space<smem>>) -> (i32, i32, i32, i32) {
    %0 = arith.index_cast %arg0 : i32 to index
    %1 = memref.load %arg1[%0] : memref<2xi32, #tpu.memory_space<smem>>
    %c0_i32 = arith.constant 0 : i32
    %c0_i32_0 = arith.constant 0 : i32
    %c0_i32_1 = arith.constant 0 : i32
    %c0_i32_2 = arith.constant 0 : i32
    return %1, %c0_i32, %c0_i32_0, %c0_i32_1 : i32, i32, i32, i32
  }
  func.func @transform_1(%arg0: i32, %arg1: memref<2xi32, #tpu.memory_space<smem>>) -> (i32, i32, i32) {
    %c0_i32 = arith.constant 0 : i32
    %c0_i32_0 = arith.constant 0 : i32
    %c0_i32_1 = arith.constant 0 : i32
    return %arg0, %c0_i32, %c0_i32_0 : i32, i32, i32
  }
  func.func @transform_2(%arg0: i32, %arg1: memref<2xi32, #tpu.memory_space<smem>>) -> (i32, i32, i32) {
    %c0_i32 = arith.constant 0 : i32
    %c0_i32_0 = arith.constant 0 : i32
    %c0_i32_1 = arith.constant 0 : i32
    return %arg0, %c0_i32, %c0_i32_0 : i32, i32, i32
  }
  func.func @transform_3(%arg0: i32, %arg1: memref<2xi32, #tpu.memory_space<smem>>) -> (i32, i32, i32, i32) {
    %c0_i32 = arith.constant 0 : i32
    %c0_i32_0 = arith.constant 0 : i32
    %c0_i32_1 = arith.constant 0 : i32
    %c0_i32_2 = arith.constant 0 : i32
    return %arg0, %c0_i32, %c0_i32_0, %c0_i32_1 : i32, i32, i32, i32
  }
}

</mosaic_0001>

<llo_original>
// kernel: tpu_custom_call.1
$region0: #{tpu_custom_call.1}
  #allocation0 [shape = 'u32[]', space=smem, size = 0x4, offset = 0x4, fixed_abs, tag = 'smem constant byte address 0x4 - core index']
  #allocation1 [shape = 'u32[72,128]{1,0:T(1,128)}', space=vmem, size = 0x9000, scoped, tag = 'internal scratch']
  #allocation2 [shape = 's32[1]{0}', space=sflag, size = 0x4, scoped, tag = 'scoped memory for tpu_custom_call.1']
  #allocation3 [shape = 'u8[512]{0}', space=smem, size = 0x200, scoped, tag = 'prefetched SMEM operand 0']
  %s0 = inlined_call_operand.vmem [shape: s32[2], index: 0, kind: input, shape index: {}]
  %s1 = inlined_call_operand.vmem [shape: f32[2,4,16,16], index: 1, kind: input, shape index: {}]
  %s2 = inlined_call_operand.vmem [shape: f32[16,7,16], index: 2, kind: input, shape index: {}]
  %s3 = inlined_call_operand.vmem [shape: f32[16,16,7], index: 3, kind: input, shape index: {}]
  %s4 = inlined_call_operand.vmem [shape: f32[16,4,7,7], index: 4, kind: output, shape index: {}]
  %s5 = sld [smem:[#allocation0]]
  $region45: #{tpu_custom_call.1} parent=0
    _
  %s7 = ssub.s32 1, %s5
  %s8 = scalar_select 0, %s7, %s5
  %s10 = sshll.u32 %s0, 4
  %s11 = int_to_ptr.vmem [resolvable:$true] %s10
  %13 = dma.vmem_to_smem %s11, 16, [#allocation3], [#allocation2]
  %15 = dma.done [#allocation2], 16
  %16 = sfence
  loop: start=0, step=1, limit=4
  $region2: #{tpu_custom_call.1} parent=0 // loop_pre_header
    _
  $region3: #{tpu_custom_call.1} parent=0 // loop_header
    %s18 = sphi 0, %s22
    %p19 = scmp.ge.s32.totalorder %s18, 4
    %s30 = sphi 0, %s32
    %s33 = sphi 0, %s30
    %s34 = sphi 0, %s33
    %s50 = sphi 0, %s34
    %s56 = sphi 0, %s58
    %s59 = sphi 0, %s56
    %s60 = sphi 0, %s59
    %s76 = sphi 0, %s60
    %s82 = sphi 0, %s84
    %s85 = sphi 0, %s82
    %s86 = sphi 0, %s85
    %s102 = sphi 0, %s86
    %s108 = sphi 0, %s110
    %s111 = sphi 0, %s108
    %s112 = sphi 0, %s111
    %s128 = sphi 0, %s112
  $region4: #{tpu_custom_call.1} parent=0 // loop_header_branch
    %21 = sbr.rel (%p19) target = $region8
  $region5: #{tpu_custom_call.1} parent=0 // loop_body
    %s23 = ssub.s32 %s18, 1
    %s24 = ssub.s32 %s18, 2
    %s25 = sadd.s32 %s18, 1
    %s26 = sld [smem:[#allocation3 + %s18]]
    %s27 = sld [smem:[#allocation3 + %s25]]
    %s28 = ssub.s32 %s26, %s27
    %p29 = scmp.eq.s32.totalorder %s28, 0
    %s31 = sadd.s32 %s30, 1
    %s32 = scalar_select %p29, %s30, %s31
    %p35 = pneg %p29
    %p36 = scmp.eq.s32.totalorder %s18, 1
    %p37 = por %p35, %p36
    %p38 = scmp.ne.s32.totalorder %s30, %s33
    %p39 = scmp.eq.s32.totalorder %s18, 0
    %p40 = por %p38, %p39
    %p41 = scmp.ne.s32.totalorder %s30, %s33
    %p42 = scmp.eq.s32.totalorder %s23, 1
    %p43 = por %p41, %p42
    %p44 = scmp.ne.s32.totalorder %s33, %s34
    %p45 = scmp.eq.s32.totalorder %s23, 0
    %p46 = por %p44, %p45
    %p47 = scmp.ne.s32.totalorder %s33, %s34
    %p48 = scmp.eq.s32.totalorder %s24, 1
    %p49 = por %p47, %p48
    %p51 = scmp.ne.s32.totalorder %s34, %s50
    %p52 = scmp.eq.s32.totalorder %s24, 0
    %p53 = por %p51, %p52
    %s54 = ssub.s32 %s18, %s25
    %p55 = scmp.eq.s32.totalorder %s54, 0
    %s57 = sadd.s32 %s56, 1
    %s58 = scalar_select %p55, %s56, %s57
    %p61 = pneg %p55
    %p62 = scmp.eq.s32.totalorder %s18, 1
    %p63 = por %p61, %p62
    %p64 = scmp.ne.s32.totalorder %s56, %s59
    %p65 = scmp.eq.s32.totalorder %s18, 0
    %p66 = por %p64, %p65
    %p67 = scmp.ne.s32.totalorder %s56, %s59
    %p68 = scmp.eq.s32.totalorder %s23, 1
    %p69 = por %p67, %p68
    %p70 = scmp.ne.s32.totalorder %s59, %s60
    %p71 = scmp.eq.s32.totalorder %s23, 0
    %p72 = por %p70, %p71
    %p73 = scmp.ne.s32.totalorder %s59, %s60
    %p74 = scmp.eq.s32.totalorder %s24, 1
    %p75 = por %p73, %p74
    %p77 = scmp.ne.s32.totalorder %s60, %s76
    %p78 = scmp.eq.s32.totalorder %s24, 0
    %p79 = por %p77, %p78
    %s80 = ssub.s32 %s18, %s25
    %p81 = scmp.eq.s32.totalorder %s80, 0
    %s83 = sadd.s32 %s82, 1
    %s84 = scalar_select %p81, %s82, %s83
    %p87 = pneg %p81
    %p88 = scmp.eq.s32.totalorder %s18, 1
    %p89 = por %p87, %p88
    %p90 = scmp.ne.s32.totalorder %s82, %s85
    %p91 = scmp.eq.s32.totalorder %s18, 0
    %p92 = por %p90, %p91
    %p93 = scmp.ne.s32.totalorder %s82, %s85
    %p94 = scmp.eq.s32.totalorder %s23, 1
    %p95 = por %p93, %p94
    %p96 = scmp.ne.s32.totalorder %s85, %s86
    %p97 = scmp.eq.s32.totalorder %s23, 0
    %p98 = por %p96, %p97
    %p99 = scmp.ne.s32.totalorder %s85, %s86
    %p100 = scmp.eq.s32.totalorder %s24, 1
    %p101 = por %p99, %p100
    %p103 = scmp.ne.s32.totalorder %s86, %s102
    %p104 = scmp.eq.s32.totalorder %s24, 0
    %p105 = por %p103, %p104
    %s106 = ssub.s32 %s18, %s25
    %p107 = scmp.eq.s32.totalorder %s106, 0
    %s109 = sadd.s32 %s108, 1
    %s110 = scalar_select %p107, %s108, %s109
    %p113 = pneg %p107
    %p114 = scmp.eq.s32.totalorder %s18, 1
    %p115 = por %p113, %p114
    %p116 = scmp.ne.s32.totalorder %s108, %s111
    %p117 = scmp.eq.s32.totalorder %s18, 0
    %p118 = por %p116, %p117
    %p119 = scmp.ne.s32.totalorder %s108, %s111
    %p120 = scmp.eq.s32.totalorder %s23, 1
    %p121 = por %p119, %p120
    %p122 = scmp.ne.s32.totalorder %s111, %s112
    %p123 = scmp.eq.s32.totalorder %s23, 0
    %p124 = por %p122, %p123
    %p125 = scmp.ne.s32.totalorder %s111, %s112
    %p126 = scmp.eq.s32.totalorder %s24, 1
    %p127 = por %p125, %p126
    %p129 = scmp.ne.s32.totalorder %s112, %s128
    %p130 = scmp.eq.s32.totalorder %s24, 0
    %p131 = por %p129, %p130
    %p132 = scmp.le.s32.totalorder 1, %s18
    %p133 = scmp.lt.s32.totalorder %s18, 3
    %p134 = pnand %p132, %p133
    %p135 = pneg %p134
    // Predicated region
    $region9: #{tpu_custom_call.1} parent=5 // pred_check
      _
    $region10: #{tpu_custom_call.1} parent=5 // pred_check_branch
      %137 = sbr.rel (%p134) target = $region12
    $region11: #{tpu_custom_call.1} parent=5 // pred_region
      %s138 = ssub.s32 %s18, 1
    $region12: #{tpu_custom_call.1} parent=5 // pred_fallthru
      _
    %p139 = scmp.lt.s32.totalorder %s18, 2
    // Predicated region
    $region13: #{tpu_custom_call.1} parent=5 // pred_check
      %p140 = pneg %p139
    $region14: #{tpu_custom_call.1} parent=5 // pred_check_branch
      %142 = sbr.rel (%p140) target = $region16
    $region15: #{tpu_custom_call.1} parent=5 // pred_region
      // Predicated region
      $region17: #{tpu_custom_call.1} parent=15 // pred_check
        %p143 = pneg %p40
      $region18: #{tpu_custom_call.1} parent=15 // pred_check_branch
        %145 = sbr.rel (%p143) target = $region20
      $region19: #{tpu_custom_call.1} parent=15 // pred_region
        %s146 = sld [smem:[#allocation3 + %s18]]
        %p147 = scmp.lt.s32.totalorder %s146, 1
        %s148 = scalar_select %p147, %s146, 1
        %s149 = smul.addr %s148, 8
        %s150 = smul.addr %s149, 8
        %s151 = scalar_lea.vmem %s1, %s150
        %s152 = sld [smem:[#allocation3 + %s18]]
      $region20: #{tpu_custom_call.1} parent=15 // pred_fallthru
        _
      // Predicated region
      $region21: #{tpu_custom_call.1} parent=15 // pred_check
        %p153 = pneg %p66
      $region22: #{tpu_custom_call.1} parent=15 // pred_check_branch
        %155 = sbr.rel (%p153) target = $region24
      $region23: #{tpu_custom_call.1} parent=15 // pred_region
        %s156 = smul.u32 8, %s18
        %p157 = scmp.lt.s32.totalorder %s156, 15
        %s158 = scalar_select %p157, %s156, 15
        %s159 = smul.addr %s158, 8
        %s160 = scalar_lea.vmem %s2, %s159
        %s161 = smul.u32 8, %s18
      $region24: #{tpu_custom_call.1} parent=15 // pred_fallthru
        _
      // Predicated region
      $region25: #{tpu_custom_call.1} parent=15 // pred_check
        %p162 = pneg %p92
      $region26: #{tpu_custom_call.1} parent=15 // pred_check_branch
        %164 = sbr.rel (%p162) target = $region28
      $region27: #{tpu_custom_call.1} parent=15 // pred_region
        %s165 = smul.u32 8, %s18
        %p166 = scmp.lt.s32.totalorder %s165, 15
        %s167 = scalar_select %p166, %s165, 15
        %s168 = smul.addr %s167, 2
        %s169 = smul.addr %s168, 8
        %s170 = scalar_lea.vmem %s3, %s169
        %s171 = smul.u32 8, %s18
      $region28: #{tpu_custom_call.1} parent=15 // pred_fallthru
        _
    $region16: #{tpu_custom_call.1} parent=5 // pred_fallthru
      _
    %p172 = scmp.le.s32.totalorder 1, %s18
    %p173 = scmp.lt.s32.totalorder %s18, 3
    %p174 = pnand %p172, %p173
    %p175 = pneg %p174
    // Predicated region
    $region29: #{tpu_custom_call.1} parent=5 // pred_check
      _
    $region30: #{tpu_custom_call.1} parent=5 // pred_check_branch
      %177 = sbr.rel (%p174) target = $region32
    $region31: #{tpu_custom_call.1} parent=5 // pred_region
      %s178 = ssub.s32 %s18, 1
      %s179 = sld [smem:[#allocation3 + %s23]]
      %p180 = scmp.lt.s32.totalorder %s179, 1
      %s181 = scalar_select %p180, %s179, 1
      %s182 = smul.addr %s181, 8
      %s183 = smul.addr %s182, 8
      %s184 = scalar_lea.vmem %s1, %s183
      %p185 = pneg %p46
      %p186 = pneg %p43
      %s187 = smul.u32 8, %s23
      %p188 = scmp.lt.s32.totalorder %s187, 15
      %s189 = scalar_select %p188, %s187, 15
      %s190 = smul.addr %s189, 8
      %s191 = scalar_lea.vmem %s2, %s190
      %p192 = pneg %p72
      %p193 = pneg %p69
      %s194 = smul.u32 8, %s23
      %p195 = scmp.lt.s32.totalorder %s194, 15
      %s196 = scalar_select %p195, %s194, 15
      %s197 = smul.addr %s196, 2
      %s198 = smul.addr %s197, 8
      %s199 = scalar_lea.vmem %s3, %s198
      %p200 = pneg %p98
      %p201 = pneg %p95
      %p202 = pneg %p124
      %p203 = pneg %p121
      %s204 = smul.u32 8, %s23
      %p205 = scmp.lt.s32.totalorder %s204, 15
      %s206 = scalar_select %p205, %s204, 15
      %s207 = smul.addr %s206, 4
      %s208 = smul.addr %s207, 8
      %s209 = scalar_lea.vmem %s4, %s208
      %s210 = sld [smem:[#allocation3 + %s23]]
      %p211 = scmp.lt.s32.totalorder %s210, 1
      %s212 = scalar_select %p211, %s210, 1
      %s213 = smul.addr %s212, 8
      %s214 = smul.addr %s213, 8
      %s215 = scalar_lea.vmem %s1, %s214
      %s216 = sld [smem:[#allocation3 + %s23]]
      %s217 = smul.u32 8, %s23
      %p218 = scmp.lt.s32.totalorder %s217, 15
      %s219 = scalar_select %p218, %s217, 15
      %s220 = smul.addr %s219, 8
      %s221 = scalar_lea.vmem %s2, %s220
      %s222 = smul.u32 8, %s23
      %s223 = smul.u32 8, %s23
      %p224 = scmp.lt.s32.totalorder %s223, 15
      %s225 = scalar_select %p224, %s223, 15
      %s226 = smul.addr %s225, 2
      %s227 = smul.addr %s226, 8
      %s228 = scalar_lea.vmem %s3, %s227
      %s229 = smul.u32 8, %s23
      %s230 = smul.u32 8, %s23
      %p231 = scmp.lt.s32.totalorder %s230, 15
      %s232 = scalar_select %p231, %s230, 15
      %s233 = smul.addr %s232, 4
      %s234 = smul.addr %s233, 8
      %s235 = scalar_lea.vmem %s4, %s234
      %s236 = smul.u32 8, %s23
      %v237 = vld [vmem:[%s215] sm:$0xff]
      %v238 = vld [vmem:[%s215 + $0x8] sm:$0xff]
      %v239 = vld [vmem:[%s215 + $0x10] sm:$0xff]
      %v240 = vld [vmem:[%s215 + $0x18] sm:$0xff]
      %v241 = vld [vmem:[%s215 + $0x20] sm:$0xff]
      %v242 = vld [vmem:[%s215 + $0x28] sm:$0xff]
      %v243 = vld [vmem:[%s215 + $0x30] sm:$0xff]
      %v244 = vld [vmem:[%s215 + $0x38] sm:$0xff]
      %v245 = vld [vmem:[%s228] sm:$0xff]
      %v246 = vld [vmem:[%s228 + $0x8] sm:$0xff]
      %vm247 = vcmask 130048
      %v249 = vsel %vm247, %v237, 0
      %v252 = vsel %vm247, %v238, 0
      %v255 = vsel %vm247, %v239, 0
      %v258 = vsel %vm247, %v240, 0
      %v261 = vsel %vm247, %v241, 0
      %v264 = vsel %vm247, %v242, 0
      %v267 = vsel %vm247, %v243, 0
      %v270 = vsel %vm247, %v244, 0
      %272 = vmatpush.msra.mxu0 0.0
      %273 = vmatpush.msra.mxu0 0.0
      %274 = vmatpush.msra.mxu0 0.0
      %275 = vmatpush.msra.mxu0 0.0
      %276 = vmatpush.msra.mxu0 0.0
      %277 = vmatpush.msra.mxu0 0.0
      %278 = vmatpush.msra.mxu0 0.0
      %279 = vmatpush.msra.mxu0 0.0
      %280 = vmatpush.msra.mxu0 0.0
      %281 = vmatpush.msra.mxu0 0.0
      %282 = vmatpush.msra.mxu0 0.0
      %283 = vmatpush.msra.mxu0 0.0
      %284 = vmatpush.msra.mxu0 0.0
      %285 = vmatpush.msra.mxu0 0.0
      %286 = vmatpush.msra.mxu0 %v246
      %287 = vmatpush.msra.mxu0 %v245
      %288 = vmatmul.f32.gmra.mxu0 %v249
      %v289 = vpop.f32.mrf.mxu0
      %v290 = vadd.f32 0.0, %v289
      %291 = vmatmul.f32.gmra.mxu0 %v252
      %v292 = vpop.f32.mrf.mxu0
      %v293 = vadd.f32 0.0, %v292
      %294 = vmatmul.f32.gmra.mxu0 %v255
      %v295 = vpop.f32.mrf.mxu0
      %v296 = vadd.f32 0.0, %v295
      %297 = vmatmul.f32.gmra.mxu0 %v258
      %v298 = vpop.f32.mrf.mxu0
      %v299 = vadd.f32 0.0, %v298
      %300 = vmatmul.f32.gmra.mxu0 %v261
      %v301 = vpop.f32.mrf.mxu0
      %v302 = vadd.f32 0.0, %v301
      %303 = vmatmul.f32.gmra.mxu0 %v264
      %v304 = vpop.f32.mrf.mxu0
      %v305 = vadd.f32 0.0, %v304
      %306 = vmatmul.f32.gmra.mxu0 %v267
      %v307 = vpop.f32.mrf.mxu0
      %v308 = vadd.f32 0.0, %v307
      %309 = vmatmul.f32.gmra.mxu0 %v270
      %v310 = vpop.f32.mrf.mxu0
      %v311 = vadd.f32 0.0, %v310
      %312 = vdwg.mxu0
      %v313 = vld [vmem:[%s221] sm:$0x7f]
      %v315 = vsel %vm247, %v313, 0
      %317 = vmatpush.msra.mxu0 0.0
      %318 = vmatpush.msra.mxu0 0.0
      %319 = vmatpush.msra.mxu0 0.0
      %320 = vmatpush.msra.mxu0 0.0
      %321 = vmatpush.msra.mxu0 0.0
      %322 = vmatpush.msra.mxu0 0.0
      %323 = vmatpush.msra.mxu0 0.0
      %324 = vmatpush.msra.mxu0 0.0
      %325 = vmatpush.msra.mxu0 0.0
      %326 = vmatpush.msra.mxu0 0.0
      %327 = vmatpush.msra.mxu0 0.0
      %328 = vmatpush.msra.mxu0 0.0
      %329 = vmatpush.msra.mxu0 0.0
      %330 = vmatpush.msra.mxu0 0.0
      %331 = vmatpush.msra.mxu0 %v293
      %332 = vmatpush.msra.mxu0 %v290
      %333 = vmatmul.f32.gmra.mxu0 %v315
      %v334 = vpop.f32.mrf.mxu0
      %v335 = vadd.f32 0.0, %v334
      %336 = vdwg.mxu0
      %337 = vmatpush.msra.mxu0 0.0
      %338 = vmatpush.msra.mxu0 0.0
      %339 = vmatpush.msra.mxu0 0.0
      %340 = vmatpush.msra.mxu0 0.0
      %341 = vmatpush.msra.mxu0 0.0
      %342 = vmatpush.msra.mxu0 0.0
      %343 = vmatpush.msra.mxu0 0.0
      %344 = vmatpush.msra.mxu0 0.0
      %345 = vmatpush.msra.mxu0 0.0
      %346 = vmatpush.msra.mxu0 0.0
      %347 = vmatpush.msra.mxu0 0.0
      %348 = vmatpush.msra.mxu0 0.0
      %349 = vmatpush.msra.mxu0 0.0
      %350 = vmatpush.msra.mxu0 0.0
      %351 = vmatpush.msra.mxu0 %v299
      %352 = vmatpush.msra.mxu0 %v296
      %353 = vmatmul.f32.gmra.mxu0 %v315
      %v354 = vpop.f32.mrf.mxu0
      %v355 = vadd.f32 0.0, %v354
      %356 = vdwg.mxu0
      %357 = vmatpush.msra.mxu0 0.0
      %358 = vmatpush.msra.mxu0 0.0
      %359 = vmatpush.msra.mxu0 0.0
      %360 = vmatpush.msra.mxu0 0.0
      %361 = vmatpush.msra.mxu0 0.0
      %362 = vmatpush.msra.mxu0 0.0
      %363 = vmatpush.msra.mxu0 0.0
      %364 = vmatpush.msra.mxu0 0.0
      %365 = vmatpush.msra.mxu0 0.0
      %366 = vmatpush.msra.mxu0 0.0
      %367 = vmatpush.msra.mxu0 0.0
      %368 = vmatpush.msra.mxu0 0.0
      %369 = vmatpush.msra.mxu0 0.0
      %370 = vmatpush.msra.mxu0 0.0
      %371 = vmatpush.msra.mxu0 %v305
      %372 = vmatpush.msra.mxu0 %v302
      %373 = vmatmul.f32.gmra.mxu0 %v315
      %v374 = vpop.f32.mrf.mxu0
      %v375 = vadd.f32 0.0, %v374
      %376 = vdwg.mxu0
      %377 = vmatpush.msra.mxu0 0.0
      %378 = vmatpush.msra.mxu0 0.0
      %379 = vmatpush.msra.mxu0 0.0
      %380 = vmatpush.msra.mxu0 0.0
      %381 = vmatpush.msra.mxu0 0.0
      %382 = vmatpush.msra.mxu0 0.0
      %383 = vmatpush.msra.mxu0 0.0
      %384 = vmatpush.msra.mxu0 0.0
      %385 = vmatpush.msra.mxu0 0.0
      %386 = vmatpush.msra.mxu0 0.0
      %387 = vmatpush.msra.mxu0 0.0
      %388 = vmatpush.msra.mxu0 0.0
      %389 = vmatpush.msra.mxu0 0.0
      %390 = vmatpush.msra.mxu0 0.0
      %391 = vmatpush.msra.mxu0 %v311
      %392 = vmatpush.msra.mxu0 %v308
      %393 = vmatmul.f32.gmra.mxu0 %v315
      %v394 = vpop.f32.mrf.mxu0
      %v395 = vadd.f32 0.0, %v394
      %396 = vdwg.mxu0
      %vm397 = vcmask 55296
      %398 = vst.msk [vmem:[%s235] sm:$0x7f] %vm397, %v335
      %399 = vst.msk [vmem:[%s235 + $0x8] sm:$0x7f] %vm397, %v355
      %400 = vst.msk [vmem:[%s235 + $0x10] sm:$0x7f] %vm397, %v375
      %401 = vst.msk [vmem:[%s235 + $0x18] sm:$0x7f] %vm397, %v395
      %s402 = scalar_lea.vmem %s228, 16
      %v403 = vld [vmem:[%s402] sm:$0xff]
      %v404 = vld [vmem:[%s402 + $0x8] sm:$0xff]
      %405 = vmatpush.msra.mxu0 0.0
      %406 = vmatpush.msra.mxu0 0.0
      %407 = vmatpush.msra.mxu0 0.0
      %408 = vmatpush.msra.mxu0 0.0
      %409 = vmatpush.msra.mxu0 0.0
      %410 = vmatpush.msra.mxu0 0.0
      %411 = vmatpush.msra.mxu0 0.0
      %412 = vmatpush.msra.mxu0 0.0
      %413 = vmatpush.msra.mxu0 0.0
      %414 = vmatpush.msra.mxu0 0.0
      %415 = vmatpush.msra.mxu0 0.0
      %416 = vmatpush.msra.mxu0 0.0
      %417 = vmatpush.msra.mxu0 0.0
      %418 = vmatpush.msra.mxu0 0.0
      %419 = vmatpush.msra.mxu0 %v404
      %420 = vmatpush.msra.mxu0 %v403
      %421 = vmatmul.f32.gmra.mxu0 %v249
      %v422 = vpop.f32.mrf.mxu0
      %v423 = vadd.f32 0.0, %v422
      %424 = vmatmul.f32.gmra.mxu0 %v252
      %v425 = vpop.f32.mrf.mxu0
      %v426 = vadd.f32 0.0, %v425
      %427 = vmatmul.f32.gmra.mxu0 %v255
      %v428 = vpop.f32.mrf.mxu0
      %v429 = vadd.f32 0.0, %v428
      %430 = vmatmul.f32.gmra.mxu0 %v258
      %v431 = vpop.f32.mrf.mxu0
      %v432 = vadd.f32 0.0, %v431
      %433 = vmatmul.f32.gmra.mxu0 %v261
      %v434 = vpop.f32.mrf.mxu0
      %v435 = vadd.f32 0.0, %v434
      %436 = vmatmul.f32.gmra.mxu0 %v264
      %v437 = vpop.f32.mrf.mxu0
      %v438 = vadd.f32 0.0, %v437
      %439 = vmatmul.f32.gmra.mxu0 %v267
      %v440 = vpop.f32.mrf.mxu0
      %v441 = vadd.f32 0.0, %v440
      %442 = vmatmul.f32.gmra.mxu0 %v270
      %v443 = vpop.f32.mrf.mxu0
      %v444 = vadd.f32 0.0, %v443
      %445 = vdwg.mxu0
      %s446 = scalar_lea.vmem %s221, 8
      %v447 = vld [vmem:[%s446] sm:$0x7f]
      %v449 = vsel %vm247, %v447, 0
      %451 = vmatpush.msra.mxu0 0.0
      %452 = vmatpush.msra.mxu0 0.0
      %453 = vmatpush.msra.mxu0 0.0
      %454 = vmatpush.msra.mxu0 0.0
      %455 = vmatpush.msra.mxu0 0.0
      %456 = vmatpush.msra.mxu0 0.0
      %457 = vmatpush.msra.mxu0 0.0
      %458 = vmatpush.msra.mxu0 0.0
      %459 = vmatpush.msra.mxu0 0.0
      %460 = vmatpush.msra.mxu0 0.0
      %461 = vmatpush.msra.mxu0 0.0
      %462 = vmatpush.msra.mxu0 0.0
      %463 = vmatpush.msra.mxu0 0.0
      %464 = vmatpush.msra.mxu0 0.0
      %465 = vmatpush.msra.mxu0 %v426
      %466 = vmatpush.msra.mxu0 %v423
      %467 = vmatmul.f32.gmra.mxu0 %v449
      %v468 = vpop.f32.mrf.mxu0
      %v469 = vadd.f32 0.0, %v468
      %470 = vdwg.mxu0
      %471 = vmatpush.msra.mxu0 0.0
      %472 = vmatpush.msra.mxu0 0.0
      %473 = vmatpush.msra.mxu0 0.0
      %474 = vmatpush.msra.mxu0 0.0
      %475 = vmatpush.msra.mxu0 0.0
      %476 = vmatpush.msra.mxu0 0.0
      %477 = vmatpush.msra.mxu0 0.0
      %478 = vmatpush.msra.mxu0 0.0
      %479 = vmatpush.msra.mxu0 0.0
      %480 = vmatpush.msra.mxu0 0.0
      %481 = vmatpush.msra.mxu0 0.0
      %482 = vmatpush.msra.mxu0 0.0
      %483 = vmatpush.msra.mxu0 0.0
      %484 = vmatpush.msra.mxu0 0.0
      %485 = vmatpush.msra.mxu0 %v432
      %486 = vmatpush.msra.mxu0 %v429
      %487 = vmatmul.f32.gmra.mxu0 %v449
      %v488 = vpop.f32.mrf.mxu0
      %v489 = vadd.f32 0.0, %v488
      %490 = vdwg.mxu0
      %491 = vmatpush.msra.mxu0 0.0
      %492 = vmatpush.msra.mxu0 0.0
      %493 = vmatpush.msra.mxu0 0.0
      %494 = vmatpush.msra.mxu0 0.0
      %495 = vmatpush.msra.mxu0 0.0
      %496 = vmatpush.msra.mxu0 0.0
      %497 = vmatpush.msra.mxu0 0.0
      %498 = vmatpush.msra.mxu0 0.0
      %499 = vmatpush.msra.mxu0 0.0
      %500 = vmatpush.msra.mxu0 0.0
      %501 = vmatpush.msra.mxu0 0.0
      %502 = vmatpush.msra.mxu0 0.0
      %503 = vmatpush.msra.mxu0 0.0
      %504 = vmatpush.msra.mxu0 0.0
      %505 = vmatpush.msra.mxu0 %v438
      %506 = vmatpush.msra.mxu0 %v435
      %507 = vmatmul.f32.gmra.mxu0 %v449
      %v508 = vpop.f32.mrf.mxu0
      %v509 = vadd.f32 0.0, %v508
      %510 = vdwg.mxu0
      %511 = vmatpush.msra.mxu0 0.0
      %512 = vmatpush.msra.mxu0 0.0
      %513 = vmatpush.msra.mxu0 0.0
      %514 = vmatpush.msra.mxu0 0.0
      %515 = vmatpush.msra.mxu0 0.0
      %516 = vmatpush.msra.mxu0 0.0
      %517 = vmatpush.msra.mxu0 0.0
      %518 = vmatpush.msra.mxu0 0.0
      %519 = vmatpush.msra.mxu0 0.0
      %520 = vmatpush.msra.mxu0 0.0
      %521 = vmatpush.msra.mxu0 0.0
      %522 = vmatpush.msra.mxu0 0.0
      %523 = vmatpush.msra.mxu0 0.0
      %524 = vmatpush.msra.mxu0 0.0
      %525 = vmatpush.msra.mxu0 %v444
      %526 = vmatpush.msra.mxu0 %v441
      %527 = vmatmul.f32.gmra.mxu0 %v449
      %v528 = vpop.f32.mrf.mxu0
      %v529 = vadd.f32 0.0, %v528
      %530 = vdwg.mxu0
      %s531 = scalar_lea.vmem %s235, 32
      %532 = vst.msk [vmem:[%s531] sm:$0x7f] %vm397, %v469
      %533 = vst.msk [vmem:[%s531 + $0x8] sm:$0x7f] %vm397, %v489
      %534 = vst.msk [vmem:[%s531 + $0x10] sm:$0x7f] %vm397, %v509
      %535 = vst.msk [vmem:[%s531 + $0x18] sm:$0x7f] %vm397, %v529
      %s536 = scalar_lea.vmem %s228, 32
      %v537 = vld [vmem:[%s536] sm:$0xff]
      %v538 = vld [vmem:[%s536 + $0x8] sm:$0xff]
      %539 = vmatpush.msra.mxu0 0.0
      %540 = vmatpush.msra.mxu0 0.0
      %541 = vmatpush.msra.mxu0 0.0
      %542 = vmatpush.msra.mxu0 0.0
      %543 = vmatpush.msra.mxu0 0.0
      %544 = vmatpush.msra.mxu0 0.0
      %545 = vmatpush.msra.mxu0 0.0
      %546 = vmatpush.msra.mxu0 0.0
      %547 = vmatpush.msra.mxu0 0.0
      %548 = vmatpush.msra.mxu0 0.0
      %549 = vmatpush.msra.mxu0 0.0
      %550 = vmatpush.msra.mxu0 0.0
      %551 = vmatpush.msra.mxu0 0.0
      %552 = vmatpush.msra.mxu0 0.0
      %553 = vmatpush.msra.mxu0 %v538
      %554 = vmatpush.msra.mxu0 %v537
      %555 = vmatmul.f32.gmra.mxu0 %v249
      %v556 = vpop.f32.mrf.mxu0
      %v557 = vadd.f32 0.0, %v556
      %558 = vmatmul.f32.gmra.mxu0 %v252
      %v559 = vpop.f32.mrf.mxu0
      %v560 = vadd.f32 0.0, %v559
      %561 = vmatmul.f32.gmra.mxu0 %v255
      %v562 = vpop.f32.mrf.mxu0
      %v563 = vadd.f32 0.0, %v562
      %564 = vmatmul.f32.gmra.mxu0 %v258
      %v565 = vpop.f32.mrf.mxu0
      %v566 = vadd.f32 0.0, %v565
      %567 = vmatmul.f32.gmra.mxu0 %v261
      %v568 = vpop.f32.mrf.mxu0
      %v569 = vadd.f32 0.0, %v568
      %570 = vmatmul.f32.gmra.mxu0 %v264
      %v571 = vpop.f32.mrf.mxu0
      %v572 = vadd.f32 0.0, %v571
      %573 = vmatmul.f32.gmra.mxu0 %v267
      %v574 = vpop.f32.mrf.mxu0
      %v575 = vadd.f32 0.0, %v574
      %576 = vmatmul.f32.gmra.mxu0 %v270
      %v577 = vpop.f32.mrf.mxu0
      %v578 = vadd.f32 0.0, %v577
      %579 = vdwg.mxu0
      %s580 = scalar_lea.vmem %s221, 16
      %v581 = vld [vmem:[%s580] sm:$0x7f]
      %v583 = vsel %vm247, %v581, 0
      %585 = vmatpush.msra.mxu0 0.0
      %586 = vmatpush.msra.mxu0 0.0
      %587 = vmatpush.msra.mxu0 0.0
      %588 = vmatpush.msra.mxu0 0.0
      %589 = vmatpush.msra.mxu0 0.0
      %590 = vmatpush.msra.mxu0 0.0
      %591 = vmatpush.msra.mxu0 0.0
      %592 = vmatpush.msra.mxu0 0.0
      %593 = vmatpush.msra.mxu0 0.0
      %594 = vmatpush.msra.mxu0 0.0
      %595 = vmatpush.msra.mxu0 0.0
      %596 = vmatpush.msra.mxu0 0.0
      %597 = vmatpush.msra.mxu0 0.0
      %598 = vmatpush.msra.mxu0 0.0
      %599 = vmatpush.msra.mxu0 %v560
      %600 = vmatpush.msra.mxu0 %v557
      %601 = vmatmul.f32.gmra.mxu0 %v583
      %v602 = vpop.f32.mrf.mxu0
      %v603 = vadd.f32 0.0, %v602
      %604 = vdwg.mxu0
      %605 = vmatpush.msra.mxu0 0.0
      %606 = vmatpush.msra.mxu0 0.0
      %607 = vmatpush.msra.mxu0 0.0
      %608 = vmatpush.msra.mxu0 0.0
      %609 = vmatpush.msra.mxu0 0.0
      %610 = vmatpush.msra.mxu0 0.0
      %611 = vmatpush.msra.mxu0 0.0
      %612 = vmatpush.msra.mxu0 0.0
      %613 = vmatpush.msra.mxu0 0.0
      %614 = vmatpush.msra.mxu0 0.0
      %615 = vmatpush.msra.mxu0 0.0
      %616 = vmatpush.msra.mxu0 0.0
      %617 = vmatpush.msra.mxu0 0.0
      %618 = vmatpush.msra.mxu0 0.0
      %619 = vmatpush.msra.mxu0 %v566
      %620 = vmatpush.msra.mxu0 %v563
      %621 = vmatmul.f32.gmra.mxu0 %v583
      %v622 = vpop.f32.mrf.mxu0
      %v623 = vadd.f32 0.0, %v622
      %624 = vdwg.mxu0
      %625 = vmatpush.msra.mxu0 0.0
      %626 = vmatpush.msra.mxu0 0.0
      %627 = vmatpush.msra.mxu0 0.0
      %628 = vmatpush.msra.mxu0 0.0
      %629 = vmatpush.msra.mxu0 0.0
      %630 = vmatpush.msra.mxu0 0.0
      %631 = vmatpush.msra.mxu0 0.0
      %632 = vmatpush.msra.mxu0 0.0
      %633 = vmatpush.msra.mxu0 0.0
      %634 = vmatpush.msra.mxu0 0.0
      %635 = vmatpush.msra.mxu0 0.0
      %636 = vmatpush.msra.mxu0 0.0
      %637 = vmatpush.msra.mxu0 0.0
      %638 = vmatpush.msra.mxu0 0.0
      %639 = vmatpush.msra.mxu0 %v572
      %640 = vmatpush.msra.mxu0 %v569
      %641 = vmatmul.f32.gmra.mxu0 %v583
      %v642 = vpop.f32.mrf.mxu0
      %v643 = vadd.f32 0.0, %v642
      %644 = vdwg.mxu0
      %645 = vmatpush.msra.mxu0 0.0
      %646 = vmatpush.msra.mxu0 0.0
      %647 = vmatpush.msra.mxu0 0.0
      %648 = vmatpush.msra.mxu0 0.0
      %649 = vmatpush.msra.mxu0 0.0
      %650 = vmatpush.msra.mxu0 0.0
      %651 = vmatpush.msra.mxu0 0.0
      %652 = vmatpush.msra.mxu0 0.0
      %653 = vmatpush.msra.mxu0 0.0
      %654 = vmatpush.msra.mxu0 0.0
      %655 = vmatpush.msra.mxu0 0.0
      %656 = vmatpush.msra.mxu0 0.0
      %657 = vmatpush.msra.mxu0 0.0
      %658 = vmatpush.msra.mxu0 0.0
      %659 = vmatpush.msra.mxu0 %v578
      %660 = vmatpush.msra.mxu0 %v575
      %661 = vmatmul.f32.gmra.mxu0 %v583
      %v662 = vpop.f32.mrf.mxu0
      %v663 = vadd.f32 0.0, %v662
      %664 = vdwg.mxu0
      %s665 = scalar_lea.vmem %s235, 64
      %666 = vst.msk [vmem:[%s665] sm:$0x7f] %vm397, %v603
      %667 = vst.msk [vmem:[%s665 + $0x8] sm:$0x7f] %vm397, %v623
      %668 = vst.msk [vmem:[%s665 + $0x10] sm:$0x7f] %vm397, %v643
      %669 = vst.msk [vmem:[%s665 + $0x18] sm:$0x7f] %vm397, %v663
      %s670 = scalar_lea.vmem %s228, 48
      %v671 = vld [vmem:[%s670] sm:$0xff]
      %v672 = vld [vmem:[%s670 + $0x8] sm:$0xff]
      %673 = vmatpush.msra.mxu0 0.0
      %674 = vmatpush.msra.mxu0 0.0
      %675 = vmatpush.msra.mxu0 0.0
      %676 = vmatpush.msra.mxu0 0.0
      %677 = vmatpush.msra.mxu0 0.0
      %678 = vmatpush.msra.mxu0 0.0
      %679 = vmatpush.msra.mxu0 0.0
      %680 = vmatpush.msra.mxu0 0.0
      %681 = vmatpush.msra.mxu0 0.0
      %682 = vmatpush.msra.mxu0 0.0
      %683 = vmatpush.msra.mxu0 0.0
      %684 = vmatpush.msra.mxu0 0.0
      %685 = vmatpush.msra.mxu0 0.0
      %686 = vmatpush.msra.mxu0 0.0
      %687 = vmatpush.msra.mxu0 %v672
      %688 = vmatpush.msra.mxu0 %v671
      %689 = vmatmul.f32.gmra.mxu0 %v249
      %v690 = vpop.f32.mrf.mxu0
      %v691 = vadd.f32 0.0, %v690
      %692 = vmatmul.f32.gmra.mxu0 %v252
      %v693 = vpop.f32.mrf.mxu0
      %v694 = vadd.f32 0.0, %v693
      %695 = vmatmul.f32.gmra.mxu0 %v255
      %v696 = vpop.f32.mrf.mxu0
      %v697 = vadd.f32 0.0, %v696
      %698 = vmatmul.f32.gmra.mxu0 %v258
      %v699 = vpop.f32.mrf.mxu0
      %v700 = vadd.f32 0.0, %v699
      %701 = vmatmul.f32.gmra.mxu0 %v261
      %v702 = vpop.f32.mrf.mxu0
      %v703 = vadd.f32 0.0, %v702
      %704 = vmatmul.f32.gmra.mxu0 %v264
      %v705 = vpop.f32.mrf.mxu0
      %v706 = vadd.f32 0.0, %v705
      %707 = vmatmul.f32.gmra.mxu0 %v267
      %v708 = vpop.f32.mrf.mxu0
      %v709 = vadd.f32 0.0, %v708
      %710 = vmatmul.f32.gmra.mxu0 %v270
      %v711 = vpop.f32.mrf.mxu0
      %v712 = vadd.f32 0.0, %v711
      %713 = vdwg.mxu0
      %s714 = scalar_lea.vmem %s221, 24
      %v715 = vld [vmem:[%s714] sm:$0x7f]
      %v717 = vsel %vm247, %v715, 0
      %719 = vmatpush.msra.mxu0 0.0
      %720 = vmatpush.msra.mxu0 0.0
      %721 = vmatpush.msra.mxu0 0.0
      %722 = vmatpush.msra.mxu0 0.0
      %723 = vmatpush.msra.mxu0 0.0
      %724 = vmatpush.msra.mxu0 0.0
      %725 = vmatpush.msra.mxu0 0.0
      %726 = vmatpush.msra.mxu0 0.0
      %727 = vmatpush.msra.mxu0 0.0
      %728 = vmatpush.msra.mxu0 0.0
      %729 = vmatpush.msra.mxu0 0.0
      %730 = vmatpush.msra.mxu0 0.0
      %731 = vmatpush.msra.mxu0 0.0
      %732 = vmatpush.msra.mxu0 0.0
      %733 = vmatpush.msra.mxu0 %v694
      %734 = vmatpush.msra.mxu0 %v691
      %735 = vmatmul.f32.gmra.mxu0 %v717
      %v736 = vpop.f32.mrf.mxu0
      %v737 = vadd.f32 0.0, %v736
      %738 = vdwg.mxu0
      %739 = vmatpush.msra.mxu0 0.0
      %740 = vmatpush.msra.mxu0 0.0
      %741 = vmatpush.msra.mxu0 0.0
      %742 = vmatpush.msra.mxu0 0.0
      %743 = vmatpush.msra.mxu0 0.0
      %744 = vmatpush.msra.mxu0 0.0
      %745 = vmatpush.msra.mxu0 0.0
      %746 = vmatpush.msra.mxu0 0.0
      %747 = vmatpush.msra.mxu0 0.0
      %748 = vmatpush.msra.mxu0 0.0
      %749 = vmatpush.msra.mxu0 0.0
      %750 = vmatpush.msra.mxu0 0.0
      %751 = vmatpush.msra.mxu0 0.0
      %752 = vmatpush.msra.mxu0 0.0
      %753 = vmatpush.msra.mxu0 %v700
      %754 = vmatpush.msra.mxu0 %v697
      %755 = vmatmul.f32.gmra.mxu0 %v717
      %v756 = vpop.f32.mrf.mxu0
      %v757 = vadd.f32 0.0, %v756
      %758 = vdwg.mxu0
      %759 = vmatpush.msra.mxu0 0.0
      %760 = vmatpush.msra.mxu0 0.0
      %761 = vmatpush.msra.mxu0 0.0
      %762 = vmatpush.msra.mxu0 0.0
      %763 = vmatpush.msra.mxu0 0.0
      %764 = vmatpush.msra.mxu0 0.0
      %765 = vmatpush.msra.mxu0 0.0
      %766 = vmatpush.msra.mxu0 0.0
      %767 = vmatpush.msra.mxu0 0.0
      %768 = vmatpush.msra.mxu0 0.0
      %769 = vmatpush.msra.mxu0 0.0
      %770 = vmatpush.msra.mxu0 0.0
      %771 = vmatpush.msra.mxu0 0.0
      %772 = vmatpush.msra.mxu0 0.0
      %773 = vmatpush.msra.mxu0 %v706
      %774 = vmatpush.msra.mxu0 %v703
      %775 = vmatmul.f32.gmra.mxu0 %v717
      %v776 = vpop.f32.mrf.mxu0
      %v777 = vadd.f32 0.0, %v776
      %778 = vdwg.mxu0
      %779 = vmatpush.msra.mxu0 0.0
      %780 = vmatpush.msra.mxu0 0.0
      %781 = vmatpush.msra.mxu0 0.0
      %782 = vmatpush.msra.mxu0 0.0
      %783 = vmatpush.msra.mxu0 0.0
      %784 = vmatpush.msra.mxu0 0.0
      %785 = vmatpush.msra.mxu0 0.0
      %786 = vmatpush.msra.mxu0 0.0
      %787 = vmatpush.msra.mxu0 0.0
      %788 = vmatpush.msra.mxu0 0.0
      %789 = vmatpush.msra.mxu0 0.0
      %790 = vmatpush.msra.mxu0 0.0
      %791 = vmatpush.msra.mxu0 0.0
      %792 = vmatpush.msra.mxu0 0.0
      %793 = vmatpush.msra.mxu0 %v712
      %794 = vmatpush.msra.mxu0 %v709
      %795 = vmatmul.f32.gmra.mxu0 %v717
      %v796 = vpop.f32.mrf.mxu0
      %v797 = vadd.f32 0.0, %v796
      %798 = vdwg.mxu0
      %s799 = scalar_lea.vmem %s235, 96
      %800 = vst.msk [vmem:[%s799] sm:$0x7f] %vm397, %v737
      %801 = vst.msk [vmem:[%s799 + $0x8] sm:$0x7f] %vm397, %v757
      %802 = vst.msk [vmem:[%s799 + $0x10] sm:$0x7f] %vm397, %v777
      %803 = vst.msk [vmem:[%s799 + $0x18] sm:$0x7f] %vm397, %v797
      %s804 = scalar_lea.vmem %s228, 64
      %v805 = vld [vmem:[%s804] sm:$0xff]
      %v806 = vld [vmem:[%s804 + $0x8] sm:$0xff]
      %807 = vmatpush.msra.mxu0 0.0
      %808 = vmatpush.msra.mxu0 0.0
      %809 = vmatpush.msra.mxu0 0.0
      %810 = vmatpush.msra.mxu0 0.0
      %811 = vmatpush.msra.mxu0 0.0
      %812 = vmatpush.msra.mxu0 0.0
      %813 = vmatpush.msra.mxu0 0.0
      %814 = vmatpush.msra.mxu0 0.0
      %815 = vmatpush.msra.mxu0 0.0
      %816 = vmatpush.msra.mxu0 0.0
      %817 = vmatpush.msra.mxu0 0.0
      %818 = vmatpush.msra.mxu0 0.0
      %819 = vmatpush.msra.mxu0 0.0
      %820 = vmatpush.msra.mxu0 0.0
      %821 = vmatpush.msra.mxu0 %v806
      %822 = vmatpush.msra.mxu0 %v805
      %823 = vmatmul.f32.gmra.mxu0 %v249
      %v824 = vpop.f32.mrf.mxu0
      %v825 = vadd.f32 0.0, %v824
      %826 = vmatmul.f32.gmra.mxu0 %v252
      %v827 = vpop.f32.mrf.mxu0
      %v828 = vadd.f32 0.0, %v827
      %829 = vmatmul.f32.gmra.mxu0 %v255
      %v830 = vpop.f32.mrf.mxu0
      %v831 = vadd.f32 0.0, %v830
      %832 = vmatmul.f32.gmra.mxu0 %v258
      %v833 = vpop.f32.mrf.mxu0
      %v834 = vadd.f32 0.0, %v833
      %835 = vmatmul.f32.gmra.mxu0 %v261
      %v836 = vpop.f32.mrf.mxu0
      %v837 = vadd.f32 0.0, %v836
      %838 = vmatmul.f32.gmra.mxu0 %v264
      %v839 = vpop.f32.mrf.mxu0
      %v840 = vadd.f32 0.0, %v839
      %841 = vmatmul.f32.gmra.mxu0 %v267
      %v842 = vpop.f32.mrf.mxu0
      %v843 = vadd.f32 0.0, %v842
      %844 = vmatmul.f32.gmra.mxu0 %v270
      %v845 = vpop.f32.mrf.mxu0
      %v846 = vadd.f32 0.0, %v845
      %847 = vdwg.mxu0
      %s848 = scalar_lea.vmem %s221, 32
      %v849 = vld [vmem:[%s848] sm:$0x7f]
      %v851 = vsel %vm247, %v849, 0
      %853 = vmatpush.msra.mxu0 0.0
      %854 = vmatpush.msra.mxu0 0.0
      %855 = vmatpush.msra.mxu0 0.0
      %856 = vmatpush.msra.mxu0 0.0
      %857 = vmatpush.msra.mxu0 0.0
      %858 = vmatpush.msra.mxu0 0.0
      %859 = vmatpush.msra.mxu0 0.0
      %860 = vmatpush.msra.mxu0 0.0
      %861 = vmatpush.msra.mxu0 0.0
      %862 = vmatpush.msra.mxu0 0.0
      %863 = vmatpush.msra.mxu0 0.0
      %864 = vmatpush.msra.mxu0 0.0
      %865 = vmatpush.msra.mxu0 0.0
      %866 = vmatpush.msra.mxu0 0.0
      %867 = vmatpush.msra.mxu0 %v828
      %868 = vmatpush.msra.mxu0 %v825
      %869 = vmatmul.f32.gmra.mxu0 %v851
      %v870 = vpop.f32.mrf.mxu0
      %v871 = vadd.f32 0.0, %v870
      %872 = vdwg.mxu0
      %873 = vmatpush.msra.mxu0 0.0
      %874 = vmatpush.msra.mxu0 0.0
      %875 = vmatpush.msra.mxu0 0.0
      %876 = vmatpush.msra.mxu0 0.0
      %877 = vmatpush.msra.mxu0 0.0
      %878 = vmatpush.msra.mxu0 0.0
      %879 = vmatpush.msra.mxu0 0.0
      %880 = vmatpush.msra.mxu0 0.0
      %881 = vmatpush.msra.mxu0 0.0
      %882 = vmatpush.msra.mxu0 0.0
      %883 = vmatpush.msra.mxu0 0.0
      %884 = vmatpush.msra.mxu0 0.0
      %885 = vmatpush.msra.mxu0 0.0
      %886 = vmatpush.msra.mxu0 0.0
      %887 = vmatpush.msra.mxu0 %v834
      %888 = vmatpush.msra.mxu0 %v831
      %889 = vmatmul.f32.gmra.mxu0 %v851
      %v890 = vpop.f32.mrf.mxu0
      %v891 = vadd.f32 0.0, %v890
      %892 = vdwg.mxu0
      %893 = vmatpush.msra.mxu0 0.0
      %894 = vmatpush.msra.mxu0 0.0
      %895 = vmatpush.msra.mxu0 0.0
      %896 = vmatpush.msra.mxu0 0.0
      %897 = vmatpush.msra.mxu0 0.0
      %898 = vmatpush.msra.mxu0 0.0
      %899 = vmatpush.msra.mxu0 0.0
      %900 = vmatpush.msra.mxu0 0.0
      %901 = vmatpush.msra.mxu0 0.0
      %902 = vmatpush.msra.mxu0 0.0
      %903 = vmatpush.msra.mxu0 0.0
      %904 = vmatpush.msra.mxu0 0.0
      %905 = vmatpush.msra.mxu0 0.0
      %906 = vmatpush.msra.mxu0 0.0
      %907 = vmatpush.msra.mxu0 %v840
      %908 = vmatpush.msra.mxu0 %v837
      %909 = vmatmul.f32.gmra.mxu0 %v851
      %v910 = vpop.f32.mrf.mxu0
      %v911 = vadd.f32 0.0, %v910
      %912 = vdwg.mxu0
      %913 = vmatpush.msra.mxu0 0.0
      %914 = vmatpush.msra.mxu0 0.0
      %915 = vmatpush.msra.mxu0 0.0
      %916 = vmatpush.msra.mxu0 0.0
      %917 = vmatpush.msra.mxu0 0.0
      %918 = vmatpush.msra.mxu0 0.0
      %919 = vmatpush.msra.mxu0 0.0
      %920 = vmatpush.msra.mxu0 0.0
      %921 = vmatpush.msra.mxu0 0.0
      %922 = vmatpush.msra.mxu0 0.0
      %923 = vmatpush.msra.mxu0 0.0
      %924 = vmatpush.msra.mxu0 0.0
      %925 = vmatpush.msra.mxu0 0.0
      %926 = vmatpush.msra.mxu0 0.0
      %927 = vmatpush.msra.mxu0 %v846
      %928 = vmatpush.msra.mxu0 %v843
      %929 = vmatmul.f32.gmra.mxu0 %v851
      %v930 = vpop.f32.mrf.mxu0
      %v931 = vadd.f32 0.0, %v930
      %932 = vdwg.mxu0
      %s933 = scalar_lea.vmem %s235, 128
      %934 = vst.msk [vmem:[%s933] sm:$0x7f] %vm397, %v871
      %935 = vst.msk [vmem:[%s933 + $0x8] sm:$0x7f] %vm397, %v891
      %936 = vst.msk [vmem:[%s933 + $0x10] sm:$0x7f] %vm397, %v911
      %937 = vst.msk [vmem:[%s933 + $0x18] sm:$0x7f] %vm397, %v931
      %s938 = scalar_lea.vmem %s228, 80
      %v939 = vld [vmem:[%s938] sm:$0xff]
      %v940 = vld [vmem:[%s938 + $0x8] sm:$0xff]
      %941 = vmatpush.msra.mxu0 0.0
      %942 = vmatpush.msra.mxu0 0.0
      %943 = vmatpush.msra.mxu0 0.0
      %944 = vmatpush.msra.mxu0 0.0
      %945 = vmatpush.msra.mxu0 0.0
      %946 = vmatpush.msra.mxu0 0.0
      %947 = vmatpush.msra.mxu0 0.0
      %948 = vmatpush.msra.mxu0 0.0
      %949 = vmatpush.msra.mxu0 0.0
      %950 = vmatpush.msra.mxu0 0.0
      %951 = vmatpush.msra.mxu0 0.0
      %952 = vmatpush.msra.mxu0 0.0
      %953 = vmatpush.msra.mxu0 0.0
      %954 = vmatpush.msra.mxu0 0.0
      %955 = vmatpush.msra.mxu0 %v940
      %956 = vmatpush.msra.mxu0 %v939
      %957 = vmatmul.f32.gmra.mxu0 %v249
      %v958 = vpop.f32.mrf.mxu0
      %v959 = vadd.f32 0.0, %v958
      %960 = vmatmul.f32.gmra.mxu0 %v252
      %v961 = vpop.f32.mrf.mxu0
      %v962 = vadd.f32 0.0, %v961
      %963 = vmatmul.f32.gmra.mxu0 %v255
      %v964 = vpop.f32.mrf.mxu0
      %v965 = vadd.f32 0.0, %v964
      %966 = vmatmul.f32.gmra.mxu0 %v258
      %v967 = vpop.f32.mrf.mxu0
      %v968 = vadd.f32 0.0, %v967
      %969 = vmatmul.f32.gmra.mxu0 %v261
      %v970 = vpop.f32.mrf.mxu0
      %v971 = vadd.f32 0.0, %v970
      %972 = vmatmul.f32.gmra.mxu0 %v264
      %v973 = vpop.f32.mrf.mxu0
      %v974 = vadd.f32 0.0, %v973
      %975 = vmatmul.f32.gmra.mxu0 %v267
      %v976 = vpop.f32.mrf.mxu0
      %v977 = vadd.f32 0.0, %v976
      %978 = vmatmul.f32.gmra.mxu0 %v270
      %v979 = vpop.f32.mrf.mxu0
      %v980 = vadd.f32 0.0, %v979
      %981 = vdwg.mxu0
      %s982 = scalar_lea.vmem %s221, 40
      %v983 = vld [vmem:[%s982] sm:$0x7f]
      %v985 = vsel %vm247, %v983, 0
      %987 = vmatpush.msra.mxu0 0.0
      %988 = vmatpush.msra.mxu0 0.0
      %989 = vmatpush.msra.mxu0 0.0
      %990 = vmatpush.msra.mxu0 0.0
      %991 = vmatpush.msra.mxu0 0.0
      %992 = vmatpush.msra.mxu0 0.0
      %993 = vmatpush.msra.mxu0 0.0
      %994 = vmatpush.msra.mxu0 0.0
      %995 = vmatpush.msra.mxu0 0.0
      %996 = vmatpush.msra.mxu0 0.0
      %997 = vmatpush.msra.mxu0 0.0
      %998 = vmatpush.msra.mxu0 0.0
      %999 = vmatpush.msra.mxu0 0.0
      %1000 = vmatpush.msra.mxu0 0.0
      %1001 = vmatpush.msra.mxu0 %v962
      %1002 = vmatpush.msra.mxu0 %v959
      %1003 = vmatmul.f32.gmra.mxu0 %v985
      %v1004 = vpop.f32.mrf.mxu0
      %v1005 = vadd.f32 0.0, %v1004
      %1006 = vdwg.mxu0
      %1007 = vmatpush.msra.mxu0 0.0
      %1008 = vmatpush.msra.mxu0 0.0
      %1009 = vmatpush.msra.mxu0 0.0
      %1010 = vmatpush.msra.mxu0 0.0
      %1011 = vmatpush.msra.mxu0 0.0
      %1012 = vmatpush.msra.mxu0 0.0
      %1013 = vmatpush.msra.mxu0 0.0
      %1014 = vmatpush.msra.mxu0 0.0
      %1015 = vmatpush.msra.mxu0 0.0
      %1016 = vmatpush.msra.mxu0 0.0
      %1017 = vmatpush.msra.mxu0 0.0
      %1018 = vmatpush.msra.mxu0 0.0
      %1019 = vmatpush.msra.mxu0 0.0
      %1020 = vmatpush.msra.mxu0 0.0
      %1021 = vmatpush.msra.mxu0 %v968
      %1022 = vmatpush.msra.mxu0 %v965
      %1023 = vmatmul.f32.gmra.mxu0 %v985
      %v1024 = vpop.f32.mrf.mxu0
      %v1025 = vadd.f32 0.0, %v1024
      %1026 = vdwg.mxu0
      %1027 = vmatpush.msra.mxu0 0.0
      %1028 = vmatpush.msra.mxu0 0.0
      %1029 = vmatpush.msra.mxu0 0.0
      %1030 = vmatpush.msra.mxu0 0.0
      %1031 = vmatpush.msra.mxu0 0.0
      %1032 = vmatpush.msra.mxu0 0.0
      %1033 = vmatpush.msra.mxu0 0.0
      %1034 = vmatpush.msra.mxu0 0.0
      %1035 = vmatpush.msra.mxu0 0.0
      %1036 = vmatpush.msra.mxu0 0.0
      %1037 = vmatpush.msra.mxu0 0.0
      %1038 = vmatpush.msra.mxu0 0.0
      %1039 = vmatpush.msra.mxu0 0.0
      %1040 = vmatpush.msra.mxu0 0.0
      %1041 = vmatpush.msra.mxu0 %v974
      %1042 = vmatpush.msra.mxu0 %v971
      %1043 = vmatmul.f32.gmra.mxu0 %v985
      %v1044 = vpop.f32.mrf.mxu0
      %v1045 = vadd.f32 0.0, %v1044
      %1046 = vdwg.mxu0
      %1047 = vmatpush.msra.mxu0 0.0
      %1048 = vmatpush.msra.mxu0 0.0
      %1049 = vmatpush.msra.mxu0 0.0
      %1050 = vmatpush.msra.mxu0 0.0
      %1051 = vmatpush.msra.mxu0 0.0
      %1052 = vmatpush.msra.mxu0 0.0
      %1053 = vmatpush.msra.mxu0 0.0
      %1054 = vmatpush.msra.mxu0 0.0
      %1055 = vmatpush.msra.mxu0 0.0
      %1056 = vmatpush.msra.mxu0 0.0
      %1057 = vmatpush.msra.mxu0 0.0
      %1058 = vmatpush.msra.mxu0 0.0
      %1059 = vmatpush.msra.mxu0 0.0
      %1060 = vmatpush.msra.mxu0 0.0
      %1061 = vmatpush.msra.mxu0 %v980
      %1062 = vmatpush.msra.mxu0 %v977
      %1063 = vmatmul.f32.gmra.mxu0 %v985
      %v1064 = vpop.f32.mrf.mxu0
      %v1065 = vadd.f32 0.0, %v1064
      %1066 = vdwg.mxu0
      %s1067 = scalar_lea.vmem %s235, 160
      %1068 = vst.msk [vmem:[%s1067] sm:$0x7f] %vm397, %v1005
      %1069 = vst.msk [vmem:[%s1067 + $0x8] sm:$0x7f] %vm397, %v1025
      %1070 = vst.msk [vmem:[%s1067 + $0x10] sm:$0x7f] %vm397, %v1045
      %1071 = vst.msk [vmem:[%s1067 + $0x18] sm:$0x7f] %vm397, %v1065
      %s1072 = scalar_lea.vmem %s228, 96
      %v1073 = vld [vmem:[%s1072] sm:$0xff]
      %v1074 = vld [vmem:[%s1072 + $0x8] sm:$0xff]
      %1075 = vmatpush.msra.mxu0 0.0
      %1076 = vmatpush.msra.mxu0 0.0
      %1077 = vmatpush.msra.mxu0 0.0
      %1078 = vmatpush.msra.mxu0 0.0
      %1079 = vmatpush.msra.mxu0 0.0
      %1080 = vmatpush.msra.mxu0 0.0
      %1081 = vmatpush.msra.mxu0 0.0
      %1082 = vmatpush.msra.mxu0 0.0
      %1083 = vmatpush.msra.mxu0 0.0
      %1084 = vmatpush.msra.mxu0 0.0
      %1085 = vmatpush.msra.mxu0 0.0
      %1086 = vmatpush.msra.mxu0 0.0
      %1087 = vmatpush.msra.mxu0 0.0
      %1088 = vmatpush.msra.mxu0 0.0
      %1089 = vmatpush.msra.mxu0 %v1074
      %1090 = vmatpush.msra.mxu0 %v1073
      %1091 = vmatmul.f32.gmra.mxu0 %v249
      %v1092 = vpop.f32.mrf.mxu0
      %v1093 = vadd.f32 0.0, %v1092
      %1094 = vmatmul.f32.gmra.mxu0 %v252
      %v1095 = vpop.f32.mrf.mxu0
      %v1096 = vadd.f32 0.0, %v1095
      %1097 = vmatmul.f32.gmra.mxu0 %v255
      %v1098 = vpop.f32.mrf.mxu0
      %v1099 = vadd.f32 0.0, %v1098
      %1100 = vmatmul.f32.gmra.mxu0 %v258
      %v1101 = vpop.f32.mrf.mxu0
      %v1102 = vadd.f32 0.0, %v1101
      %1103 = vmatmul.f32.gmra.mxu0 %v261
      %v1104 = vpop.f32.mrf.mxu0
      %v1105 = vadd.f32 0.0, %v1104
      %1106 = vmatmul.f32.gmra.mxu0 %v264
      %v1107 = vpop.f32.mrf.mxu0
      %v1108 = vadd.f32 0.0, %v1107
      %1109 = vmatmul.f32.gmra.mxu0 %v267
      %v1110 = vpop.f32.mrf.mxu0
      %v1111 = vadd.f32 0.0, %v1110
      %1112 = vmatmul.f32.gmra.mxu0 %v270
      %v1113 = vpop.f32.mrf.mxu0
      %v1114 = vadd.f32 0.0, %v1113
      %1115 = vdwg.mxu0
      %s1116 = scalar_lea.vmem %s221, 48
      %v1117 = vld [vmem:[%s1116] sm:$0x7f]
      %v1119 = vsel %vm247, %v1117, 0
      %1121 = vmatpush.msra.mxu0 0.0
      %1122 = vmatpush.msra.mxu0 0.0
      %1123 = vmatpush.msra.mxu0 0.0
      %1124 = vmatpush.msra.mxu0 0.0
      %1125 = vmatpush.msra.mxu0 0.0
      %1126 = vmatpush.msra.mxu0 0.0
      %1127 = vmatpush.msra.mxu0 0.0
      %1128 = vmatpush.msra.mxu0 0.0
      %1129 = vmatpush.msra.mxu0 0.0
      %1130 = vmatpush.msra.mxu0 0.0
      %1131 = vmatpush.msra.mxu0 0.0
      %1132 = vmatpush.msra.mxu0 0.0
      %1133 = vmatpush.msra.mxu0 0.0
      %1134 = vmatpush.msra.mxu0 0.0
      %1135 = vmatpush.msra.mxu0 %v1096
      %1136 = vmatpush.msra.mxu0 %v1093
      %1137 = vmatmul.f32.gmra.mxu0 %v1119
      %v1138 = vpop.f32.mrf.mxu0
      %v1139 = vadd.f32 0.0, %v1138
      %1140 = vdwg.mxu0
      %1141 = vmatpush.msra.mxu0 0.0
      %1142 = vmatpush.msra.mxu0 0.0
      %1143 = vmatpush.msra.mxu0 0.0
      %1144 = vmatpush.msra.mxu0 0.0
      %1145 = vmatpush.msra.mxu0 0.0
      %1146 = vmatpush.msra.mxu0 0.0
      %1147 = vmatpush.msra.mxu0 0.0
      %1148 = vmatpush.msra.mxu0 0.0
      %1149 = vmatpush.msra.mxu0 0.0
      %1150 = vmatpush.msra.mxu0 0.0
      %1151 = vmatpush.msra.mxu0 0.0
      %1152 = vmatpush.msra.mxu0 0.0
      %1153 = vmatpush.msra.mxu0 0.0
      %1154 = vmatpush.msra.mxu0 0.0
      %1155 = vmatpush.msra.mxu0 %v1102
      %1156 = vmatpush.msra.mxu0 %v1099
      %1157 = vmatmul.f32.gmra.mxu0 %v1119
      %v1158 = vpop.f32.mrf.mxu0
      %v1159 = vadd.f32 0.0, %v1158
      %1160 = vdwg.mxu0
      %1161 = vmatpush.msra.mxu0 0.0
      %1162 = vmatpush.msra.mxu0 0.0
      %1163 = vmatpush.msra.mxu0 0.0
      %1164 = vmatpush.msra.mxu0 0.0
      %1165 = vmatpush.msra.mxu0 0.0
      %1166 = vmatpush.msra.mxu0 0.0
      %1167 = vmatpush.msra.mxu0 0.0
      %1168 = vmatpush.msra.mxu0 0.0
      %1169 = vmatpush.msra.mxu0 0.0
      %1170 = vmatpush.msra.mxu0 0.0
      %1171 = vmatpush.msra.mxu0 0.0
      %1172 = vmatpush.msra.mxu0 0.0
      %1173 = vmatpush.msra.mxu0 0.0
      %1174 = vmatpush.msra.mxu0 0.0
      %1175 = vmatpush.msra.mxu0 %v1108
      %1176 = vmatpush.msra.mxu0 %v1105
      %1177 = vmatmul.f32.gmra.mxu0 %v1119
      %v1178 = vpop.f32.mrf.mxu0
      %v1179 = vadd.f32 0.0, %v1178
      %1180 = vdwg.mxu0
      %1181 = vmatpush.msra.mxu0 0.0
      %1182 = vmatpush.msra.mxu0 0.0
      %1183 = vmatpush.msra.mxu0 0.0
      %1184 = vmatpush.msra.mxu0 0.0
      %1185 = vmatpush.msra.mxu0 0.0
      %1186 = vmatpush.msra.mxu0 0.0
      %1187 = vmatpush.msra.mxu0 0.0
      %1188 = vmatpush.msra.mxu0 0.0
      %1189 = vmatpush.msra.mxu0 0.0
      %1190 = vmatpush.msra.mxu0 0.0
      %1191 = vmatpush.msra.mxu0 0.0
      %1192 = vmatpush.msra.mxu0 0.0
      %1193 = vmatpush.msra.mxu0 0.0
      %1194 = vmatpush.msra.mxu0 0.0
      %1195 = vmatpush.msra.mxu0 %v1114
      %1196 = vmatpush.msra.mxu0 %v1111
      %1197 = vmatmul.f32.gmra.mxu0 %v1119
      %v1198 = vpop.f32.mrf.mxu0
      %v1199 = vadd.f32 0.0, %v1198
      %1200 = vdwg.mxu0
      %s1201 = scalar_lea.vmem %s235, 192
      %1202 = vst.msk [vmem:[%s1201] sm:$0x7f] %vm397, %v1139
      %1203 = vst.msk [vmem:[%s1201 + $0x8] sm:$0x7f] %vm397, %v1159
      %1204 = vst.msk [vmem:[%s1201 + $0x10] sm:$0x7f] %vm397, %v1179
      %1205 = vst.msk [vmem:[%s1201 + $0x18] sm:$0x7f] %vm397, %v1199
      %s1206 = scalar_lea.vmem %s228, 112
      %v1207 = vld [vmem:[%s1206] sm:$0xff]
      %v1208 = vld [vmem:[%s1206 + $0x8] sm:$0xff]
      %1209 = vmatpush.msra.mxu0 0.0
      %1210 = vmatpush.msra.mxu0 0.0
      %1211 = vmatpush.msra.mxu0 0.0
      %1212 = vmatpush.msra.mxu0 0.0
      %1213 = vmatpush.msra.mxu0 0.0
      %1214 = vmatpush.msra.mxu0 0.0
      %1215 = vmatpush.msra.mxu0 0.0
      %1216 = vmatpush.msra.mxu0 0.0
      %1217 = vmatpush.msra.mxu0 0.0
      %1218 = vmatpush.msra.mxu0 0.0
      %1219 = vmatpush.msra.mxu0 0.0
      %1220 = vmatpush.msra.mxu0 0.0
      %1221 = vmatpush.msra.mxu0 0.0
      %1222 = vmatpush.msra.mxu0 0.0
      %1223 = vmatpush.msra.mxu0 %v1208
      %1224 = vmatpush.msra.mxu0 %v1207
      %1225 = vmatmul.f32.gmra.mxu0 %v249
      %v1226 = vpop.f32.mrf.mxu0
      %v1227 = vadd.f32 0.0, %v1226
      %1228 = vmatmul.f32.gmra.mxu0 %v252
      %v1229 = vpop.f32.mrf.mxu0
      %v1230 = vadd.f32 0.0, %v1229
      %1231 = vmatmul.f32.gmra.mxu0 %v255
      %v1232 = vpop.f32.mrf.mxu0
      %v1233 = vadd.f32 0.0, %v1232
      %1234 = vmatmul.f32.gmra.mxu0 %v258
      %v1235 = vpop.f32.mrf.mxu0
      %v1236 = vadd.f32 0.0, %v1235
      %1237 = vmatmul.f32.gmra.mxu0 %v261
      %v1238 = vpop.f32.mrf.mxu0
      %v1239 = vadd.f32 0.0, %v1238
      %1240 = vmatmul.f32.gmra.mxu0 %v264
      %v1241 = vpop.f32.mrf.mxu0
      %v1242 = vadd.f32 0.0, %v1241
      %1243 = vmatmul.f32.gmra.mxu0 %v267
      %v1244 = vpop.f32.mrf.mxu0
      %v1245 = vadd.f32 0.0, %v1244
      %1246 = vmatmul.f32.gmra.mxu0 %v270
      %v1247 = vpop.f32.mrf.mxu0
      %v1248 = vadd.f32 0.0, %v1247
      %1249 = vdwg.mxu0
      %s1250 = scalar_lea.vmem %s221, 56
      %v1251 = vld [vmem:[%s1250] sm:$0x7f]
      %v1253 = vsel %vm247, %v1251, 0
      %1255 = vmatpush.msra.mxu0 0.0
      %1256 = vmatpush.msra.mxu0 0.0
      %1257 = vmatpush.msra.mxu0 0.0
      %1258 = vmatpush.msra.mxu0 0.0
      %1259 = vmatpush.msra.mxu0 0.0
      %1260 = vmatpush.msra.mxu0 0.0
      %1261 = vmatpush.msra.mxu0 0.0
      %1262 = vmatpush.msra.mxu0 0.0
      %1263 = vmatpush.msra.mxu0 0.0
      %1264 = vmatpush.msra.mxu0 0.0
      %1265 = vmatpush.msra.mxu0 0.0
      %1266 = vmatpush.msra.mxu0 0.0
      %1267 = vmatpush.msra.mxu0 0.0
      %1268 = vmatpush.msra.mxu0 0.0
      %1269 = vmatpush.msra.mxu0 %v1230
      %1270 = vmatpush.msra.mxu0 %v1227
      %1271 = vmatmul.f32.gmra.mxu0 %v1253
      %v1272 = vpop.f32.mrf.mxu0
      %v1273 = vadd.f32 0.0, %v1272
      %1274 = vdwg.mxu0
      %1275 = vmatpush.msra.mxu0 0.0
      %1276 = vmatpush.msra.mxu0 0.0
      %1277 = vmatpush.msra.mxu0 0.0
      %1278 = vmatpush.msra.mxu0 0.0
      %1279 = vmatpush.msra.mxu0 0.0
      %1280 = vmatpush.msra.mxu0 0.0
      %1281 = vmatpush.msra.mxu0 0.0
      %1282 = vmatpush.msra.mxu0 0.0
      %1283 = vmatpush.msra.mxu0 0.0
      %1284 = vmatpush.msra.mxu0 0.0
      %1285 = vmatpush.msra.mxu0 0.0
      %1286 = vmatpush.msra.mxu0 0.0
      %1287 = vmatpush.msra.mxu0 0.0
      %1288 = vmatpush.msra.mxu0 0.0
      %1289 = vmatpush.msra.mxu0 %v1236
      %1290 = vmatpush.msra.mxu0 %v1233
      %1291 = vmatmul.f32.gmra.mxu0 %v1253
      %v1292 = vpop.f32.mrf.mxu0
      %v1293 = vadd.f32 0.0, %v1292
      %1294 = vdwg.mxu0
      %1295 = vmatpush.msra.mxu0 0.0
      %1296 = vmatpush.msra.mxu0 0.0
      %1297 = vmatpush.msra.mxu0 0.0
      %1298 = vmatpush.msra.mxu0 0.0
      %1299 = vmatpush.msra.mxu0 0.0
      %1300 = vmatpush.msra.mxu0 0.0
      %1301 = vmatpush.msra.mxu0 0.0
      %1302 = vmatpush.msra.mxu0 0.0
      %1303 = vmatpush.msra.mxu0 0.0
      %1304 = vmatpush.msra.mxu0 0.0
      %1305 = vmatpush.msra.mxu0 0.0
      %1306 = vmatpush.msra.mxu0 0.0
      %1307 = vmatpush.msra.mxu0 0.0
      %1308 = vmatpush.msra.mxu0 0.0
      %1309 = vmatpush.msra.mxu0 %v1242
      %1310 = vmatpush.msra.mxu0 %v1239
      %1311 = vmatmul.f32.gmra.mxu0 %v1253
      %v1312 = vpop.f32.mrf.mxu0
      %v1313 = vadd.f32 0.0, %v1312
      %1314 = vdwg.mxu0
      %1315 = vmatpush.msra.mxu0 0.0
      %1316 = vmatpush.msra.mxu0 0.0
      %1317 = vmatpush.msra.mxu0 0.0
      %1318 = vmatpush.msra.mxu0 0.0
      %1319 = vmatpush.msra.mxu0 0.0
      %1320 = vmatpush.msra.mxu0 0.0
      %1321 = vmatpush.msra.mxu0 0.0
      %1322 = vmatpush.msra.mxu0 0.0
      %1323 = vmatpush.msra.mxu0 0.0
      %1324 = vmatpush.msra.mxu0 0.0
      %1325 = vmatpush.msra.mxu0 0.0
      %1326 = vmatpush.msra.mxu0 0.0
      %1327 = vmatpush.msra.mxu0 0.0
      %1328 = vmatpush.msra.mxu0 0.0
      %1329 = vmatpush.msra.mxu0 %v1248
      %1330 = vmatpush.msra.mxu0 %v1245
      %1331 = vmatmul.f32.gmra.mxu0 %v1253
      %v1332 = vpop.f32.mrf.mxu0
      %v1333 = vadd.f32 0.0, %v1332
      %1334 = vdwg.mxu0
      %s1335 = scalar_lea.vmem %s235, 224
      %1336 = vst.msk [vmem:[%s1335] sm:$0x7f] %vm397, %v1273
      %1337 = vst.msk [vmem:[%s1335 + $0x8] sm:$0x7f] %vm397, %v1293
      %1338 = vst.msk [vmem:[%s1335 + $0x10] sm:$0x7f] %vm397, %v1313
      %1339 = vst.msk [vmem:[%s1335 + $0x18] sm:$0x7f] %vm397, %v1333
      %s1340 = smul.u32 8, %s23
      %p1341 = scmp.lt.s32.totalorder %s1340, 15
      %s1342 = scalar_select %p1341, %s1340, 15
      %s1343 = smul.addr %s1342, 4
      %s1344 = smul.addr %s1343, 8
      %s1345 = scalar_lea.vmem %s4, %s1344
      // Predicated region
      $region33: #{tpu_custom_call.1} parent=31 // pred_check
        %p1346 = pneg %p121
      $region34: #{tpu_custom_call.1} parent=31 // pred_check_branch
        %1348 = sbr.rel (%p1346) target = $region36
      $region35: #{tpu_custom_call.1} parent=31 // pred_region
        %s1349 = smul.u32 8, %s23
      $region36: #{tpu_custom_call.1} parent=31 // pred_fallthru
        _
    $region32: #{tpu_custom_call.1} parent=5 // pred_fallthru
      _
    %p1350 = scmp.le.s32.totalorder 2, %s18
    // Predicated region
    $region37: #{tpu_custom_call.1} parent=5 // pred_check
      %p1351 = pneg %p1350
    $region38: #{tpu_custom_call.1} parent=5 // pred_check_branch
      %1353 = sbr.rel (%p1351) target = $region40
    $region39: #{tpu_custom_call.1} parent=5 // pred_region
      %s1354 = ssub.s32 %s18, 2
      // Predicated region
      $region41: #{tpu_custom_call.1} parent=39 // pred_check
        %p1355 = pneg %p127
      $region42: #{tpu_custom_call.1} parent=39 // pred_check_branch
        %1357 = sbr.rel (%p1355) target = $region44
      $region43: #{tpu_custom_call.1} parent=39 // pred_region
        %s1358 = smul.u32 8, %s24
        %p1359 = scmp.lt.s32.totalorder %s1358, 15
        %s1360 = scalar_select %p1359, %s1358, 15
        %s1361 = smul.addr %s1360, 4
        %s1362 = smul.addr %s1361, 8
        %s1363 = scalar_lea.vmem %s4, %s1362
      $region44: #{tpu_custom_call.1} parent=39 // pred_fallthru
        _
    $region40: #{tpu_custom_call.1} parent=5 // pred_fallthru
      _
  $region6: #{tpu_custom_call.1} parent=0 // loop_footer
    %s22 = sadd.s32 1, %s18
  $region7: #{tpu_custom_call.1} parent=0 // loop_footer_branch
    %17 = sbr.rel target = $region3
  $region8: #{tpu_custom_call.1} parent=0 // loop_exit
    _

</llo_original>
